<compile_context>
chip_gen: v7x
topology: tpu7x:2x2x1
jax: 0.10.0
libtpu: 0.0.40
codegen_flags: <defaults>
</compile_context>

<pallas_src>
import functools
import math

import jax
import jax.numpy as jnp
from jax import lax
from jax.experimental import pallas as pl
from jax.experimental.pallas import tpu as pltpu


# ----------------------------------------------------------------------------
# helpers
# ----------------------------------------------------------------------------
_VMEM_LIMIT = 32 * 1024 * 1024  # safe on v5e/v6e (128 MiB phys) and v7x (64 MiB)


def _round_up(x, m):
    return ((x + m - 1) // m) * m


def _pick_row_tile(m, tm_max=256):
    """M tile: big (256) when possible, else whole (padded to sublane mult)."""
    if m >= tm_max:
        return tm_max
    return _round_up(m, 8)


def _pick_lane_tile(n, cap=1024):
    """Largest multiple of 128 dividing n (<= cap), else the full dim."""
    best = None
    for t in range(128, min(n, cap) + 1, 128):
        if n % t == 0:
            best = t
    return best if best is not None else n


def _gelu_exact(x):
    # Exact (erf) GELU — matches HF ACT2FN["gelu"] / torch.nn.GELU().
    return 0.5 * x * (1.0 + lax.erf(x * (1.0 / math.sqrt(2.0))))


# ----------------------------------------------------------------------------
# kernel 1: y = act(x @ W + b)   (W already transposed to (K, N))
# ----------------------------------------------------------------------------
def _linear_act_kernel(x_ref, w_ref, b_ref, o_ref, *, activation):
    # x_ref: (tm, K)  w_ref: (K, tn)  b_ref: (1, tn)  o_ref: (tm, tn)
    acc = jnp.dot(x_ref[...], w_ref[...], preferred_element_type=jnp.float32)
    acc = acc + b_ref[...].astype(jnp.float32)
    if activation == "gelu":
        acc = _gelu_exact(acc)
    o_ref[...] = acc.astype(o_ref.dtype)


def _linear_pallas(x2d, w_t, b2d, *, activation=None, out_dtype=None,
                   tm_max=256, tn_max=1024):
    M, K = x2d.shape
    _, N = w_t.shape
    out_dtype = out_dtype or x2d.dtype

    tm = _pick_row_tile(M, tm_max)
    Mp = _round_up(M, tm)
    tn = _pick_lane_tile(N, tn_max)
    if Mp != M:
        x2d = jnp.pad(x2d, ((0, Mp - M), (0, 0)))

    kernel = functools.partial(_linear_act_kernel, activation=activation)
    out = pl.pallas_call(
        kernel,
        out_shape=jax.ShapeDtypeStruct((Mp, N), out_dtype),
        grid_spec=pltpu.PrefetchScalarGridSpec(
            num_scalar_prefetch=0,
            # N axis OUTER so the (K, tn) weight tile stays resident across
            # all M tiles of the inner axis.
            grid=(N // tn, Mp // tm),
            in_specs=[
                pl.BlockSpec((tm, K), lambda j, i: (i, 0)),
                pl.BlockSpec((K, tn), lambda j, i: (0, j)),
                pl.BlockSpec((1, tn), lambda j, i: (0, j)),
            ],
            out_specs=pl.BlockSpec((tm, tn), lambda j, i: (i, j)),
        ),
        compiler_params=pltpu.CompilerParams(
            dimension_semantics=("parallel", "parallel"),
            vmem_limit_bytes=_VMEM_LIMIT,
        ),
    )(x2d, w_t, b2d)
    return out[:M] if Mp != M else out


# ----------------------------------------------------------------------------
# kernel 2: per (batch, head) softmax attention
# ----------------------------------------------------------------------------
def _attention_kernel(q_ref, k_ref, v_ref, m_ref, o_ref, *, scale):
    # q/k/v: (S, dH)   m_ref: (1, S) additive mask   o_ref: (S, dH)
    q = q_ref[...].astype(jnp.float32)
    k = k_ref[...].astype(jnp.float32)
    v = v_ref[...].astype(jnp.float32)
    # scores = q @ k^T  (contract last dims, no explicit transpose)
    s = lax.dot_general(q, k, (((1,), (1,)), ((), ())),
                        preferred_element_type=jnp.float32) * scale
    s = s + m_ref[...].astype(jnp.float32)          # (1, S) broadcast over rows
    s = s - jnp.max(s, axis=-1, keepdims=True)
    p = jnp.exp(s)
    p = p / jnp.sum(p, axis=-1, keepdims=True)
    o_ref[...] = jnp.dot(p, v, preferred_element_type=jnp.float32
                         ).astype(o_ref.dtype)


def _attention_pallas(q, k, v, mask_add_bh, *, out_dtype):
    # q, k, v: (B*nH, S, dH); mask_add_bh: (B*nH, 1, S) additive mask
    BH, S, dH = q.shape
    kernel = functools.partial(_attention_kernel, scale=1.0 / math.sqrt(dH))
    return pl.pallas_call(
        kernel,
        out_shape=jax.ShapeDtypeStruct((BH, S, dH), out_dtype),
        grid_spec=pltpu.PrefetchScalarGridSpec(
            num_scalar_prefetch=0,
            grid=(BH,),
            in_specs=[
                pl.BlockSpec((None, S, dH), lambda b: (b, 0, 0)),
                pl.BlockSpec((None, S, dH), lambda b: (b, 0, 0)),
                pl.BlockSpec((None, S, dH), lambda b: (b, 0, 0)),
                pl.BlockSpec((None, 1, S), lambda b: (b, 0, 0)),
            ],
            out_specs=pl.BlockSpec((None, S, dH), lambda b: (b, 0, 0)),
        ),
        compiler_params=pltpu.CompilerParams(
            dimension_semantics=("parallel",),
            vmem_limit_bytes=_VMEM_LIMIT,
        ),
    )(q, k, v, mask_add_bh)


# ----------------------------------------------------------------------------
# kernel 3: y = LayerNorm(x @ W + b + residual)   (full hidden dim per block)
# ----------------------------------------------------------------------------
def _dense_residual_ln_kernel(x_ref, w_ref, b_ref, res_ref, g_ref, beta_ref,
                              o_ref, *, eps):
    acc = jnp.dot(x_ref[...], w_ref[...], preferred_element_type=jnp.float32)
    acc = acc + b_ref[...].astype(jnp.float32) + res_ref[...].astype(jnp.float32)
    mu = jnp.mean(acc, axis=-1, keepdims=True)
    var = jnp.mean(jnp.square(acc - mu), axis=-1, keepdims=True)
    y = (acc - mu) * lax.rsqrt(var + eps)
    y = y * g_ref[...].astype(jnp.float32) + beta_ref[...].astype(jnp.float32)
    o_ref[...] = y.astype(o_ref.dtype)


def _dense_residual_ln_pallas(x2d, w_t, b2d, res2d, gamma2d, beta2d, *,
                              eps, out_dtype, tm_max=256):
    M, K = x2d.shape
    _, H = w_t.shape
    tm = _pick_row_tile(M, tm_max)
    Mp = _round_up(M, tm)
    if Mp != M:
        x2d = jnp.pad(x2d, ((0, Mp - M), (0, 0)))
        res2d = jnp.pad(res2d, ((0, Mp - M), (0, 0)))

    kernel = functools.partial(_dense_residual_ln_kernel, eps=eps)
    out = pl.pallas_call(
        kernel,
        out_shape=jax.ShapeDtypeStruct((Mp, H), out_dtype),
        grid_spec=pltpu.PrefetchScalarGridSpec(
            num_scalar_prefetch=0,
            grid=(Mp // tm,),
            in_specs=[
                pl.BlockSpec((tm, K), lambda i: (i, 0)),
                pl.BlockSpec((K, H), lambda i: (0, 0)),   # resident weight
                pl.BlockSpec((1, H), lambda i: (0, 0)),
                pl.BlockSpec((tm, H), lambda i: (i, 0)),
                pl.BlockSpec((1, H), lambda i: (0, 0)),
                pl.BlockSpec((1, H), lambda i: (0, 0)),
            ],
            out_specs=pl.BlockSpec((tm, H), lambda i: (i, 0)),
        ),
        compiler_params=pltpu.CompilerParams(
            dimension_semantics=("parallel",),
            vmem_limit_bytes=_VMEM_LIMIT,
        ),
    )(x2d, w_t, b2d, res2d, gamma2d, beta2d)
    return out[:M] if Mp != M else out


# ----------------------------------------------------------------------------
# parameter preparation (done ONCE, outside the per-call path)
# ----------------------------------------------------------------------------
def prepare_params(raw, *, compute_dtype=jnp.float32):
    """Pre-transpose torch-layout (out, in) weights to (in, out), fuse Q/K/V
    into one matmul, and (optionally) pre-cast to bf16 for MXU-native compute.
    Biases / LN params stay f32 (epilogues run in f32)."""
    d = compute_dtype
    qkv_w = jnp.concatenate([raw["q_w"], raw["k_w"], raw["v_w"]], axis=0)
    qkv_b = jnp.concatenate([raw["q_b"], raw["k_b"], raw["v_b"]], axis=0)
    f32 = jnp.float32
    return dict(
        qkv_w_t=qkv_w.T.astype(d),                       # (H, 3H)
        qkv_b=qkv_b.reshape(1, -1).astype(f32),
        attn_out_w_t=raw["attn_out_w"].T.astype(d),      # (H, H)
        attn_out_b=raw["attn_out_b"].reshape(1, -1).astype(f32),
        attn_ln_g=raw["attn_ln_g"].reshape(1, -1).astype(f32),
        attn_ln_b=raw["attn_ln_b"].reshape(1, -1).astype(f32),
        inter_w_t=raw["inter_w"].T.astype(d),            # (H, I)
        inter_b=raw["inter_b"].reshape(1, -1).astype(f32),
        out_w_t=raw["out_w"].T.astype(d),                # (I, H)
        out_b=raw["out_b"].reshape(1, -1).astype(f32),
        out_ln_g=raw["out_ln_g"].reshape(1, -1).astype(f32),
        out_ln_b=raw["out_ln_b"].reshape(1, -1).astype(f32),
    )


# ----------------------------------------------------------------------------
# full BertLayerPatched forward (encoder path)
# ----------------------------------------------------------------------------
@functools.partial(jax.jit, static_argnames=("num_heads", "ln_eps"))
def bert_layer_forward(hidden_states, params, attention_mask_add, *,
                       num_heads, ln_eps=1e-12):
    B, S, H = hidden_states.shape
    dH = H // num_heads
    dtype = hidden_states.dtype
    M = B * S
    x2d = hidden_states.reshape(M, H)
    cdt = params["qkv_w_t"].dtype          # compute dtype for matmul inputs

    # --- self-attention: fused QKV projection ---
    qkv = _linear_pallas(x2d.astype(cdt), params["qkv_w_t"], params["qkv_b"],
                         activation=None, out_dtype=dtype)
    q, k, v = jnp.split(qkv, 3, axis=-1)

    def split_heads(t):
        return (t.reshape(B, S, num_heads, dH)
                 .transpose(0, 2, 1, 3)
                 .reshape(B * num_heads, S, dH))

    qh, kh, vh = split_heads(q), split_heads(k), split_heads(v)

    if attention_mask_add is None:
        attention_mask_add = jnp.zeros((B, S), dtype=jnp.float32)
    mask_bh = jnp.broadcast_to(attention_mask_add[:, None, None, :],
                               (B, num_heads, 1, S)).reshape(B * num_heads, 1, S)

    ctx = _attention_pallas(qh.astype(cdt), kh.astype(cdt), vh.astype(cdt),
                            mask_bh, out_dtype=dtype)
    ctx = (ctx.reshape(B, num_heads, S, dH)
              .transpose(0, 2, 1, 3)
              .reshape(M, H))

    # --- attention output: dense + residual + LayerNorm ---
    attn_out = _dense_residual_ln_pallas(
        ctx.astype(cdt), params["attn_out_w_t"], params["attn_out_b"],
        x2d, params["attn_ln_g"], params["attn_ln_b"],
        eps=ln_eps, out_dtype=dtype)

    # --- intermediate: dense + GELU (fused epilogue, f32 accumulator) ---
    inter = _linear_pallas(attn_out.astype(cdt), params["inter_w_t"],
                           params["inter_b"], activation="gelu",
                           out_dtype=dtype)

    # --- output: dense + residual + LayerNorm ---
    layer_out = _dense_residual_ln_pallas(
        inter.astype(cdt), params["out_w_t"], params["out_b"],
        attn_out, params["out_ln_g"], params["out_ln_b"],
        eps=ln_eps, out_dtype=dtype)

    return layer_out.reshape(B, S, H)


# ----------------------------------------------------------------------------
# pure-JAX reference (mirrors the PyTorch module in eval mode)
# ----------------------------------------------------------------------------
def _reference_bert_layer(hidden_states, raw, *, num_heads, ln_eps, mask_add):
    B, S, H = hidden_states.shape
    dH = H // num_heads

    def linear(x, w, b):                     # torch layout: w (out, in)
        return jnp.einsum("...k,nk->...n", x, w) + b

    def split(t):
        return t.reshape(B, S, num_heads, dH).transpose(0, 2, 1, 3)

    q = split(linear(hidden_states, raw["q_w"], raw["q_b"]))
    k = split(linear(hidden_states, raw["k_w"], raw["k_b"]))
    v = split(linear(hidden_states, raw["v_w"], raw["v_b"]))

    scores = jnp.einsum("bhqd,bhkd->bhqk", q, k) / math.sqrt(dH)
    scores = scores + mask_add[:, None, None, :]
    probs = jax.nn.softmax(scores, axis=-1)
    ctx = jnp.einsum("bhqk,bhkd->bhqd", probs, v)
    ctx = ctx.transpose(0, 2, 1, 3).reshape(B, S, H)

    def ln(x, g, b):
        mu = x.mean(-1, keepdims=True)
        var = ((x - mu) ** 2).mean(-1, keepdims=True)
        return (x - mu) / jnp.sqrt(var + ln_eps) * g + b

    attn_out = ln(linear(ctx, raw["attn_out_w"], raw["attn_out_b"]) + hidden_states,
                  raw["attn_ln_g"], raw["attn_ln_b"])
    inter = _gelu_exact(linear(attn_out, raw["inter_w"], raw["inter_b"]))
    layer_out = ln(linear(inter, raw["out_w"], raw["out_b"]) + attn_out,
                   raw["out_ln_g"], raw["out_ln_b"])
    return layer_out


# ----------------------------------------------------------------------------
if __name__ == "__main__":
    # Small BERT-like config: hidden=32, heads=4 (head size 8), intermediate=128.
    B, S, H, I, NH = 2, 8, 32, 128, 4
    LN_EPS = 1e-12

    key = jax.random.PRNGKey(0)
    keys = jax.random.split(key, 16)

    def w(k_, shape, scale):
        return jax.random.normal(k_, shape, dtype=jnp.float32) * scale

    raw = dict(
        q_w=w(keys[0], (H, H), 1 / math.sqrt(H)), q_b=w(keys[1], (H,), 0.02),
        k_w=w(keys[2], (H, H), 1 / math.sqrt(H)), k_b=w(keys[3], (H,), 0.02),
        v_w=w(keys[4], (H, H), 1 / math.sqrt(H)), v_b=w(keys[5], (H,), 0.02),
        attn_out_w=w(keys[6], (H, H), 1 / math.sqrt(H)),
        attn_out_b=w(keys[7], (H,), 0.02),
        attn_ln_g=jnp.ones((H,), jnp.float32) + w(keys[8], (H,), 0.01),
        attn_ln_b=w(keys[9], (H,), 0.02),
        inter_w=w(keys[10], (I, H), 1 / math.sqrt(H)),
        inter_b=w(keys[11], (I,), 0.02),
        out_w=w(keys[12], (H, I), 1 / math.sqrt(I)),
        out_b=w(keys[13], (H,), 0.02),
        out_ln_g=jnp.ones((H,), jnp.float32),
        out_ln_b=w(keys[14], (H,), 0.02),
    )
    x = jax.random.normal(keys[15], (B, S, H), dtype=jnp.float32)

    # Attention mask: mask out the last 2 key positions of batch 1.
    keep = jnp.ones((B, S), jnp.float32).at[1, -2:].set(0.0)
    mask_add = (1.0 - keep) * (-1e9)

    # Use f32 compute for the tight numerical check; for production pass
    # compute_dtype=jnp.bfloat16 (MXU-native) — accumulation stays f32.
    params = prepare_params(raw, compute_dtype=jnp.float32)

    out = bert_layer_forward(x, params, mask_add, num_heads=NH, ln_eps=LN_EPS)
    out = jax.block_until_ready(out)

    ref = _reference_bert_layer(x, raw, num_heads=NH, ln_eps=LN_EPS,
                                mask_add=mask_add)
    assert out.shape == (B, S, H)
    assert jnp.allclose(out, ref, atol=2e-4, rtol=2e-4), "mismatch vs reference"

    print("KERNEL_OK")
</pallas_src>

<mosaic_0001>
module attributes {stable_mosaic.version = 11 : i64} {
  func.func @_linear_act_kernel(%arg0: i32, %arg1: i32, %arg2: memref<16x32xf32, #tpu.memory_space<vmem>>, %arg3: memref<32x96xf32, #tpu.memory_space<vmem>>, %arg4: memref<1x96xf32, #tpu.memory_space<vmem>>, %arg5: memref<16x96xf32, #tpu.memory_space<vmem>>) attributes {dimension_semantics = [#tpu.dimension_semantics<parallel>, #tpu.dimension_semantics<parallel>], iteration_bounds = array<i64: 1, 1>, scalar_prefetch = 0 : i64, scratch_operands = 0 : i64, tpu.core_type = #tpu.core_type<tc>, window_params = [{transform_indices = @transform_0, window_bounds = array<i64: 16, 32>}, {transform_indices = @transform_1, window_bounds = array<i64: 32, 96>}, {transform_indices = @transform_2, window_bounds = array<i64: 1, 96>}, {transform_indices = @transform_3, window_bounds = array<i64: 16, 96>}]} {
    %c0 = arith.constant 0 : index
    %c0_0 = arith.constant 0 : index
    %0 = vector.load %arg2[%c0, %c0_0] : memref<16x32xf32, #tpu.memory_space<vmem>>, vector<16x32xf32>
    %c0_1 = arith.constant 0 : index
    %c0_2 = arith.constant 0 : index
    %1 = vector.load %arg3[%c0_1, %c0_2] : memref<32x96xf32, #tpu.memory_space<vmem>>, vector<32x96xf32>
    %cst = arith.constant dense<0.000000e+00> : vector<16x96xf32>
    %2 = tpu.matmul %0, %1, %cst {dimension_numbers = #tpu.dot_dimension_numbers<[1], [0], [0], [1], [0, 0, 1, 1], [], []>} : vector<16x32xf32>, vector<32x96xf32>, vector<16x96xf32> -> vector<16x96xf32>
    %c0_3 = arith.constant 0 : index
    %c0_4 = arith.constant 0 : index
    %3 = vector.load %arg4[%c0_3, %c0_4] : memref<1x96xf32, #tpu.memory_space<vmem>>, vector<1x96xf32>
    %4 = vector.broadcast %3 : vector<1x96xf32> to vector<16x96xf32>
    %5 = arith.addf %2, %4 : vector<16x96xf32>
    %c0_5 = arith.constant 0 : index
    %c0_6 = arith.constant 0 : index
    %6 = vector.load %arg5[%c0_5, %c0_6] : memref<16x96xf32, #tpu.memory_space<vmem>>, vector<16x96xf32>
    tpu.vector_store %arg5[%c0_5, %c0_6], %5 {strides = array<i32>} : memref<16x96xf32, #tpu.memory_space<vmem>>, vector<16x96xf32>,
    return
  }
  func.func @transform_0(%arg0: i32, %arg1: i32) -> (i32, i32) {
    %c0_i32 = arith.constant 0 : i32
    %c0_i32_0 = arith.constant 0 : i32
    return %arg1, %c0_i32 : i32, i32
  }
  func.func @transform_1(%arg0: i32, %arg1: i32) -> (i32, i32) {
    %c0_i32 = arith.constant 0 : i32
    %c0_i32_0 = arith.constant 0 : i32
    return %c0_i32, %arg0 : i32, i32
  }
  func.func @transform_2(%arg0: i32, %arg1: i32) -> (i32, i32) {
    %c0_i32 = arith.constant 0 : i32
    %c0_i32_0 = arith.constant 0 : i32
    return %c0_i32, %arg0 : i32, i32
  }
  func.func @transform_3(%arg0: i32, %arg1: i32) -> (i32, i32) {
    %c0_i32 = arith.constant 0 : i32
    return %arg1, %arg0 : i32, i32
  }
}

module attributes {stable_mosaic.version = 11 : i64} {
  func.func @_attention_kernel(%arg0: i32, %arg1: memref<1x8x8xf32, #tpu.memory_space<vmem>>, %arg2: memref<1x8x8xf32, #tpu.memory_space<vmem>>, %arg3: memref<1x8x8xf32, #tpu.memory_space<vmem>>, %arg4: memref<1x1x8xf32, #tpu.memory_space<vmem>>, %arg5: memref<1x8x8xf32, #tpu.memory_space<vmem>>) attributes {dimension_semantics = [#tpu.dimension_semantics<parallel>], iteration_bounds = array<i64: 8>, scalar_prefetch = 0 : i64, scratch_operands = 0 : i64, tpu.core_type = #tpu.core_type<tc>, window_params = [{transform_indices = @transform_0, window_bounds = array<i64: 1, 8, 8>}, {transform_indices = @transform_1, window_bounds = array<i64: 1, 8, 8>}, {transform_indices = @transform_2, window_bounds = array<i64: 1, 8, 8>}, {transform_indices = @transform_3, window_bounds = array<i64: 1, 1, 8>}, {transform_indices = @transform_4, window_bounds = array<i64: 1, 8, 8>}]} {
    %c0 = arith.constant 0 : index
    %c0_0 = arith.constant 0 : index
    %c0_1 = arith.constant 0 : index
    %0 = vector.load %arg1[%c0, %c0_0, %c0_1] : memref<1x8x8xf32, #tpu.memory_space<vmem>>, vector<1x8x8xf32>
    %1 = vector.shape_cast %0 : vector<1x8x8xf32> to vector<8x8xf32>
    %c0_2 = arith.constant 0 : index
    %c0_3 = arith.constant 0 : index
    %c0_4 = arith.constant 0 : index
    %2 = vector.load %arg2[%c0_2, %c0_3, %c0_4] : memref<1x8x8xf32, #tpu.memory_space<vmem>>, vector<1x8x8xf32>
    %3 = vector.shape_cast %2 : vector<1x8x8xf32> to vector<8x8xf32>
    %c0_5 = arith.constant 0 : index
    %c0_6 = arith.constant 0 : index
    %c0_7 = arith.constant 0 : index
    %4 = vector.load %arg3[%c0_5, %c0_6, %c0_7] : memref<1x8x8xf32, #tpu.memory_space<vmem>>, vector<1x8x8xf32>
    %5 = vector.shape_cast %4 : vector<1x8x8xf32> to vector<8x8xf32>
    %cst = arith.constant dense<0.000000e+00> : vector<8x8xf32>
    %6 = tpu.matmul %1, %3, %cst {dimension_numbers = #tpu.dot_dimension_numbers<[1], [1], [0], [0], [0, 0, 1, 0], [], []>} : vector<8x8xf32>, vector<8x8xf32>, vector<8x8xf32> -> vector<8x8xf32>
    %cst_8 = arith.constant 0.353553385 : f32
    %7 = vector.broadcast %cst_8 : f32 to vector<8x8xf32>
    %8 = arith.mulf %6, %7 : vector<8x8xf32>
    %c0_9 = arith.constant 0 : index
    %c0_10 = arith.constant 0 : index
    %c0_11 = arith.constant 0 : index
    %9 = vector.load %arg4[%c0_9, %c0_10, %c0_11] : memref<1x1x8xf32, #tpu.memory_space<vmem>>, vector<1x1x8xf32>
    %10 = vector.shape_cast %9 : vector<1x1x8xf32> to vector<1x8xf32>
    %11 = vector.broadcast %10 : vector<1x8xf32> to vector<8x8xf32>
    %12 = arith.addf %8, %11 : vector<8x8xf32>
    %cst_12 = arith.constant dense<0xFF800000> : vector<8xf32>
    %13 = vector.multi_reduction <maximumf>, %12, %cst_12 [1] : vector<8x8xf32> to vector<8xf32>
    %14 = vector.shape_cast %13 : vector<8xf32> to vector<8x1xf32>
    %15 = vector.broadcast %14 : vector<8x1xf32> to vector<8x8xf32>
    %16 = arith.subf %12, %15 : vector<8x8xf32>
    %17 = math.exp %16 : vector<8x8xf32>
    %cst_13 = arith.constant dense<0.000000e+00> : vector<8xf32>
    %18 = vector.multi_reduction <add>, %17, %cst_13 [1] : vector<8x8xf32> to vector<8xf32>
    %19 = vector.shape_cast %18 : vector<8xf32> to vector<8x1xf32>
    %20 = vector.broadcast %19 : vector<8x1xf32> to vector<8x8xf32>
    %21 = arith.divf %17, %20 : vector<8x8xf32>
    %cst_14 = arith.constant dense<0.000000e+00> : vector<8x8xf32>
    %22 = tpu.matmul %21, %5, %cst_14 {dimension_numbers = #tpu.dot_dimension_numbers<[1], [0], [0], [1], [0, 0, 1, 1], [], []>} : vector<8x8xf32>, vector<8x8xf32>, vector<8x8xf32> -> vector<8x8xf32>
    %c0_15 = arith.constant 0 : index
    %c0_16 = arith.constant 0 : index
    %c0_17 = arith.constant 0 : index
    %23 = vector.load %arg5[%c0_15, %c0_16, %c0_17] : memref<1x8x8xf32, #tpu.memory_space<vmem>>, vector<1x8x8xf32>
    %24 = vector.shape_cast %23 : vector<1x8x8xf32> to vector<8x8xf32>
    %25 = vector.shape_cast %22 : vector<8x8xf32> to vector<1x8x8xf32>
    tpu.vector_store %arg5[%c0_15, %c0_16, %c0_17], %25 {strides = array<i32>} : memref<1x8x8xf32, #tpu.memory_space<vmem>>, vector<1x8x8xf32>,
    return
  }
  func.func @transform_0(%arg0: i32) -> (i32, i32, i32) {
    %c0_i32 = arith.constant 0 : i32
    %c0_i32_0 = arith.constant 0 : i32
    %c0_i32_1 = arith.constant 0 : i32
    return %arg0, %c0_i32, %c0_i32_0 : i32, i32, i32
  }
  func.func @transform_1(%arg0: i32) -> (i32, i32, i32) {
    %c0_i32 = arith.constant 0 : i32
    %c0_i32_0 = arith.constant 0 : i32
    %c0_i32_1 = arith.constant 0 : i32
    return %arg0, %c0_i32, %c0_i32_0 : i32, i32, i32
  }
  func.func @transform_2(%arg0: i32) -> (i32, i32, i32) {
    %c0_i32 = arith.constant 0 : i32
    %c0_i32_0 = arith.constant 0 : i32
    %c0_i32_1 = arith.constant 0 : i32
    return %arg0, %c0_i32, %c0_i32_0 : i32, i32, i32
  }
  func.func @transform_3(%arg0: i32) -> (i32, i32, i32) {
    %c0_i32 = arith.constant 0 : i32
    %c0_i32_0 = arith.constant 0 : i32
    %c0_i32_1 = arith.constant 0 : i32
    return %arg0, %c0_i32, %c0_i32_0 : i32, i32, i32
  }
  func.func @transform_4(%arg0: i32) -> (i32, i32, i32) {
    %c0_i32 = arith.constant 0 : i32
    %c0_i32_0 = arith.constant 0 : i32
    %c0_i32_1 = arith.constant 0 : i32
    return %arg0, %c0_i32, %c0_i32_0 : i32, i32, i32
  }
}

module attributes {stable_mosaic.version = 11 : i64} {
  func.func @_dense_residual_ln_kernel(%arg0: i32, %arg1: memref<16x32xf32, #tpu.memory_space<vmem>>, %arg2: memref<32x32xf32, #tpu.memory_space<vmem>>, %arg3: memref<1x32xf32, #tpu.memory_space<vmem>>, %arg4: memref<16x32xf32, #tpu.memory_space<vmem>>, %arg5: memref<1x32xf32, #tpu.memory_space<vmem>>, %arg6: memref<1x32xf32, #tpu.memory_space<vmem>>, %arg7: memref<16x32xf32, #tpu.memory_space<vmem>>) attributes {dimension_semantics = [#tpu.dimension_semantics<parallel>], iteration_bounds = array<i64: 1>, scalar_prefetch = 0 : i64, scratch_operands = 0 : i64, tpu.core_type = #tpu.core_type<tc>, window_params = [{transform_indices = @transform_0, window_bounds = array<i64: 16, 32>}, {pipeline_mode = #tpu.pipeline_mode<synchronous>, transform_indices = @transform_1, window_bounds = array<i64: 32, 32>}, {pipeline_mode = #tpu.pipeline_mode<synchronous>, transform_indices = @transform_2, window_bounds = array<i64: 1, 32>}, {transform_indices = @transform_3, window_bounds = array<i64: 16, 32>}, {pipeline_mode = #tpu.pipeline_mode<synchronous>, transform_indices = @transform_4, window_bounds = array<i64: 1, 32>}, {pipeline_mode = #tpu.pipeline_mode<synchronous>, transform_indices = @transform_5, window_bounds = array<i64: 1, 32>}, {transform_indices = @transform_6, window_bounds = array<i64: 16, 32>}]} {
    %c0 = arith.constant 0 : index
    %c0_0 = arith.constant 0 : index
    %0 = vector.load %arg1[%c0, %c0_0] : memref<16x32xf32, #tpu.memory_space<vmem>>, vector<16x32xf32>
    %c0_1 = arith.constant 0 : index
    %c0_2 = arith.constant 0 : index
    %1 = vector.load %arg2[%c0_1, %c0_2] : memref<32x32xf32, #tpu.memory_space<vmem>>, vector<32x32xf32>
    %cst = arith.constant dense<0.000000e+00> : vector<16x32xf32>
    %2 = tpu.matmul %0, %1, %cst {dimension_numbers = #tpu.dot_dimension_numbers<[1], [0], [0], [1], [0, 0, 1, 1], [], []>} : vector<16x32xf32>, vector<32x32xf32>, vector<16x32xf32> -> vector<16x32xf32>
    %c0_3 = arith.constant 0 : index
    %c0_4 = arith.constant 0 : index
    %3 = vector.load %arg3[%c0_3, %c0_4] : memref<1x32xf32, #tpu.memory_space<vmem>>, vector<1x32xf32>
    %4 = vector.broadcast %3 : vector<1x32xf32> to vector<16x32xf32>
    %5 = arith.addf %2, %4 : vector<16x32xf32>
    %c0_5 = arith.constant 0 : index
    %c0_6 = arith.constant 0 : index
    %6 = vector.load %arg4[%c0_5, %c0_6] : memref<16x32xf32, #tpu.memory_space<vmem>>, vector<16x32xf32>
    %7 = arith.addf %5, %6 : vector<16x32xf32>
    %cst_7 = arith.constant dense<0.000000e+00> : vector<16xf32>
    %8 = vector.multi_reduction <add>, %7, %cst_7 [1] : vector<16x32xf32> to vector<16xf32>
    %9 = vector.shape_cast %8 : vector<16xf32> to vector<16x1xf32>
    %cst_8 = arith.constant 3.200000e+01 : f32
    %10 = vector.broadcast %cst_8 : f32 to vector<16x1xf32>
    %11 = arith.divf %9, %10 : vector<16x1xf32>
    %12 = vector.broadcast %11 : vector<16x1xf32> to vector<16x32xf32>
    %13 = arith.subf %7, %12 : vector<16x32xf32>
    %14 = arith.mulf %13, %13 : vector<16x32xf32>
    %cst_9 = arith.constant dense<0.000000e+00> : vector<16xf32>
    %15 = vector.multi_reduction <add>, %14, %cst_9 [1] : vector<16x32xf32> to vector<16xf32>
    %16 = vector.shape_cast %15 : vector<16xf32> to vector<16x1xf32>
    %cst_10 = arith.constant 3.200000e+01 : f32
    %17 = vector.broadcast %cst_10 : f32 to vector<16x1xf32>
    %18 = arith.divf %16, %17 : vector<16x1xf32>
    %19 = vector.broadcast %11 : vector<16x1xf32> to vector<16x32xf32>
    %20 = arith.subf %7, %19 : vector<16x32xf32>
    %cst_11 = arith.constant 9.99999996E-13 : f32
    %21 = vector.broadcast %cst_11 : f32 to vector<16x1xf32>
    %22 = arith.addf %18, %21 : vector<16x1xf32>
    %23 = math.rsqrt %22 : vector<16x1xf32>
    %24 = vector.broadcast %23 : vector<16x1xf32> to vector<16x32xf32>
    %25 = arith.mulf %20, %24 : vector<16x32xf32>
    %c0_12 = arith.constant 0 : index
    %c0_13 = arith.constant 0 : index
    %26 = vector.load %arg5[%c0_12, %c0_13] : memref<1x32xf32, #tpu.memory_space<vmem>>, vector<1x32xf32>
    %27 = vector.broadcast %26 : vector<1x32xf32> to vector<16x32xf32>
    %28 = arith.mulf %25, %27 : vector<16x32xf32>
    %c0_14 = arith.constant 0 : index
    %c0_15 = arith.constant 0 : index
    %29 = vector.load %arg6[%c0_14, %c0_15] : memref<1x32xf32, #tpu.memory_space<vmem>>, vector<1x32xf32>
    %30 = vector.broadcast %29 : vector<1x32xf32> to vector<16x32xf32>
    %31 = arith.addf %28, %30 : vector<16x32xf32>
    %c0_16 = arith.constant 0 : index
    %c0_17 = arith.constant 0 : index
    %32 = vector.load %arg7[%c0_16, %c0_17] : memref<16x32xf32, #tpu.memory_space<vmem>>, vector<16x32xf32>
    tpu.vector_store %arg7[%c0_16, %c0_17], %31 {strides = array<i32>} : memref<16x32xf32, #tpu.memory_space<vmem>>, vector<16x32xf32>,
    return
  }
  func.func @transform_0(%arg0: i32) -> (i32, i32) {
    %c0_i32 = arith.constant 0 : i32
    %c0_i32_0 = arith.constant 0 : i32
    return %arg0, %c0_i32 : i32, i32
  }
  func.func @transform_1(%arg0: i32) -> (i32, i32) {
    %c0_i32 = arith.constant 0 : i32
    %c0_i32_0 = arith.constant 0 : i32
    %c0_i32_1 = arith.constant 0 : i32
    return %c0_i32, %c0_i32_0 : i32, i32
  }
  func.func @transform_2(%arg0: i32) -> (i32, i32) {
    %c0_i32 = arith.constant 0 : i32
    %c0_i32_0 = arith.constant 0 : i32
    %c0_i32_1 = arith.constant 0 : i32
    return %c0_i32, %c0_i32_0 : i32, i32
  }
  func.func @transform_3(%arg0: i32) -> (i32, i32) {
    %c0_i32 = arith.constant 0 : i32
    %c0_i32_0 = arith.constant 0 : i32
    return %arg0, %c0_i32 : i32, i32
  }
  func.func @transform_4(%arg0: i32) -> (i32, i32) {
    %c0_i32 = arith.constant 0 : i32
    %c0_i32_0 = arith.constant 0 : i32
    %c0_i32_1 = arith.constant 0 : i32
    return %c0_i32, %c0_i32_0 : i32, i32
  }
  func.func @transform_5(%arg0: i32) -> (i32, i32) {
    %c0_i32 = arith.constant 0 : i32
    %c0_i32_0 = arith.constant 0 : i32
    %c0_i32_1 = arith.constant 0 : i32
    return %c0_i32, %c0_i32_0 : i32, i32
  }
  func.func @transform_6(%arg0: i32) -> (i32, i32) {
    %c0_i32 = arith.constant 0 : i32
    %c0_i32_0 = arith.constant 0 : i32
    return %arg0, %c0_i32 : i32, i32
  }
}

module attributes {stable_mosaic.version = 11 : i64} {
  func.func @_linear_act_kernel(%arg0: i32, %arg1: i32, %arg2: memref<16x32xf32, #tpu.memory_space<vmem>>, %arg3: memref<32x128xf32, #tpu.memory_space<vmem>>, %arg4: memref<1x128xf32, #tpu.memory_space<vmem>>, %arg5: memref<16x128xf32, #tpu.memory_space<vmem>>) attributes {dimension_semantics = [#tpu.dimension_semantics<parallel>, #tpu.dimension_semantics<parallel>], iteration_bounds = array<i64: 1, 1>, scalar_prefetch = 0 : i64, scratch_operands = 0 : i64, tpu.core_type = #tpu.core_type<tc>, window_params = [{transform_indices = @transform_0, window_bounds = array<i64: 16, 32>}, {transform_indices = @transform_1, window_bounds = array<i64: 32, 128>}, {transform_indices = @transform_2, window_bounds = array<i64: 1, 128>}, {transform_indices = @transform_3, window_bounds = array<i64: 16, 128>}]} {
    %c0 = arith.constant 0 : index
    %c0_0 = arith.constant 0 : index
    %0 = vector.load %arg2[%c0, %c0_0] : memref<16x32xf32, #tpu.memory_space<vmem>>, vector<16x32xf32>
    %c0_1 = arith.constant 0 : index
    %c0_2 = arith.constant 0 : index
    %1 = vector.load %arg3[%c0_1, %c0_2] : memref<32x128xf32, #tpu.memory_space<vmem>>, vector<32x128xf32>
    %cst = arith.constant dense<0.000000e+00> : vector<16x128xf32>
    %2 = tpu.matmul %0, %1, %cst {dimension_numbers = #tpu.dot_dimension_numbers<[1], [0], [0], [1], [0, 0, 1, 1], [], []>} : vector<16x32xf32>, vector<32x128xf32>, vector<16x128xf32> -> vector<16x128xf32>
    %c0_3 = arith.constant 0 : index
    %c0_4 = arith.constant 0 : index
    %3 = vector.load %arg4[%c0_3, %c0_4] : memref<1x128xf32, #tpu.memory_space<vmem>>, vector<1x128xf32>
    %4 = vector.broadcast %3 : vector<1x128xf32> to vector<16x128xf32>
    %5 = arith.addf %2, %4 : vector<16x128xf32>
    %cst_5 = arith.constant 5.000000e-01 : f32
    %6 = vector.broadcast %cst_5 : f32 to vector<16x128xf32>
    %7 = arith.mulf %6, %5 : vector<16x128xf32>
    %cst_6 = arith.constant 0.707106769 : f32
    %8 = vector.broadcast %cst_6 : f32 to vector<16x128xf32>
    %9 = arith.mulf %5, %8 : vector<16x128xf32>
    %10 = math.erf %9 : vector<16x128xf32>
    %cst_7 = arith.constant 1.000000e+00 : f32
    %11 = vector.broadcast %cst_7 : f32 to vector<16x128xf32>
    %12 = arith.addf %11, %10 : vector<16x128xf32>
    %13 = arith.mulf %7, %12 : vector<16x128xf32>
    %c0_8 = arith.constant 0 : index
    %c0_9 = arith.constant 0 : index
    %14 = vector.load %arg5[%c0_8, %c0_9] : memref<16x128xf32, #tpu.memory_space<vmem>>, vector<16x128xf32>
    tpu.vector_store %arg5[%c0_8, %c0_9], %13 {strides = array<i32>} : memref<16x128xf32, #tpu.memory_space<vmem>>, vector<16x128xf32>,
    return
  }
  func.func @transform_0(%arg0: i32, %arg1: i32) -> (i32, i32) {
    %c0_i32 = arith.constant 0 : i32
    %c0_i32_0 = arith.constant 0 : i32
    return %arg1, %c0_i32 : i32, i32
  }
  func.func @transform_1(%arg0: i32, %arg1: i32) -> (i32, i32) {
    %c0_i32 = arith.constant 0 : i32
    %c0_i32_0 = arith.constant 0 : i32
    return %c0_i32, %arg0 : i32, i32
  }
  func.func @transform_2(%arg0: i32, %arg1: i32) -> (i32, i32) {
    %c0_i32 = arith.constant 0 : i32
    %c0_i32_0 = arith.constant 0 : i32
    return %c0_i32, %arg0 : i32, i32
  }
  func.func @transform_3(%arg0: i32, %arg1: i32) -> (i32, i32) {
    %c0_i32 = arith.constant 0 : i32
    return %arg1, %arg0 : i32, i32
  }
}

module attributes {stable_mosaic.version = 11 : i64} {
  func.func @_dense_residual_ln_kernel(%arg0: i32, %arg1: memref<16x128xf32, #tpu.memory_space<vmem>>, %arg2: memref<128x32xf32, #tpu.memory_space<vmem>>, %arg3: memref<1x32xf32, #tpu.memory_space<vmem>>, %arg4: memref<16x32xf32, #tpu.memory_space<vmem>>, %arg5: memref<1x32xf32, #tpu.memory_space<vmem>>, %arg6: memref<1x32xf32, #tpu.memory_space<vmem>>, %arg7: memref<16x32xf32, #tpu.memory_space<vmem>>) attributes {dimension_semantics = [#tpu.dimension_semantics<parallel>], iteration_bounds = array<i64: 1>, scalar_prefetch = 0 : i64, scratch_operands = 0 : i64, tpu.core_type = #tpu.core_type<tc>, window_params = [{transform_indices = @transform_0, window_bounds = array<i64: 16, 128>}, {pipeline_mode = #tpu.pipeline_mode<synchronous>, transform_indices = @transform_1, window_bounds = array<i64: 128, 32>}, {pipeline_mode = #tpu.pipeline_mode<synchronous>, transform_indices = @transform_2, window_bounds = array<i64: 1, 32>}, {transform_indices = @transform_3, window_bounds = array<i64: 16, 32>}, {pipeline_mode = #tpu.pipeline_mode<synchronous>, transform_indices = @transform_4, window_bounds = array<i64: 1, 32>}, {pipeline_mode = #tpu.pipeline_mode<synchronous>, transform_indices = @transform_5, window_bounds = array<i64: 1, 32>}, {transform_indices = @transform_6, window_bounds = array<i64: 16, 32>}]} {
    %c0 = arith.constant 0 : index
    %c0_0 = arith.constant 0 : index
    %0 = vector.load %arg1[%c0, %c0_0] : memref<16x128xf32, #tpu.memory_space<vmem>>, vector<16x128xf32>
    %c0_1 = arith.constant 0 : index
    %c0_2 = arith.constant 0 : index
    %1 = vector.load %arg2[%c0_1, %c0_2] : memref<128x32xf32, #tpu.memory_space<vmem>>, vector<128x32xf32>
    %cst = arith.constant dense<0.000000e+00> : vector<16x32xf32>
    %2 = tpu.matmul %0, %1, %cst {dimension_numbers = #tpu.dot_dimension_numbers<[1], [0], [0], [1], [0, 0, 1, 1], [], []>} : vector<16x128xf32>, vector<128x32xf32>, vector<16x32xf32> -> vector<16x32xf32>
    %c0_3 = arith.constant 0 : index
    %c0_4 = arith.constant 0 : index
    %3 = vector.load %arg3[%c0_3, %c0_4] : memref<1x32xf32, #tpu.memory_space<vmem>>, vector<1x32xf32>
    %4 = vector.broadcast %3 : vector<1x32xf32> to vector<16x32xf32>
    %5 = arith.addf %2, %4 : vector<16x32xf32>
    %c0_5 = arith.constant 0 : index
    %c0_6 = arith.constant 0 : index
    %6 = vector.load %arg4[%c0_5, %c0_6] : memref<16x32xf32, #tpu.memory_space<vmem>>, vector<16x32xf32>
    %7 = arith.addf %5, %6 : vector<16x32xf32>
    %cst_7 = arith.constant dense<0.000000e+00> : vector<16xf32>
    %8 = vector.multi_reduction <add>, %7, %cst_7 [1] : vector<16x32xf32> to vector<16xf32>
    %9 = vector.shape_cast %8 : vector<16xf32> to vector<16x1xf32>
    %cst_8 = arith.constant 3.200000e+01 : f32
    %10 = vector.broadcast %cst_8 : f32 to vector<16x1xf32>
    %11 = arith.divf %9, %10 : vector<16x1xf32>
    %12 = vector.broadcast %11 : vector<16x1xf32> to vector<16x32xf32>
    %13 = arith.subf %7, %12 : vector<16x32xf32>
    %14 = arith.mulf %13, %13 : vector<16x32xf32>
    %cst_9 = arith.constant dense<0.000000e+00> : vector<16xf32>
    %15 = vector.multi_reduction <add>, %14, %cst_9 [1] : vector<16x32xf32> to vector<16xf32>
    %16 = vector.shape_cast %15 : vector<16xf32> to vector<16x1xf32>
    %cst_10 = arith.constant 3.200000e+01 : f32
    %17 = vector.broadcast %cst_10 : f32 to vector<16x1xf32>
    %18 = arith.divf %16, %17 : vector<16x1xf32>
    %19 = vector.broadcast %11 : vector<16x1xf32> to vector<16x32xf32>
    %20 = arith.subf %7, %19 : vector<16x32xf32>
    %cst_11 = arith.constant 9.99999996E-13 : f32
    %21 = vector.broadcast %cst_11 : f32 to vector<16x1xf32>
    %22 = arith.addf %18, %21 : vector<16x1xf32>
    %23 = math.rsqrt %22 : vector<16x1xf32>
    %24 = vector.broadcast %23 : vector<16x1xf32> to vector<16x32xf32>
    %25 = arith.mulf %20, %24 : vector<16x32xf32>
    %c0_12 = arith.constant 0 : index
    %c0_13 = arith.constant 0 : index
    %26 = vector.load %arg5[%c0_12, %c0_13] : memref<1x32xf32, #tpu.memory_space<vmem>>, vector<1x32xf32>
    %27 = vector.broadcast %26 : vector<1x32xf32> to vector<16x32xf32>
    %28 = arith.mulf %25, %27 : vector<16x32xf32>
    %c0_14 = arith.constant 0 : index
    %c0_15 = arith.constant 0 : index
    %29 = vector.load %arg6[%c0_14, %c0_15] : memref<1x32xf32, #tpu.memory_space<vmem>>, vector<1x32xf32>
    %30 = vector.broadcast %29 : vector<1x32xf32> to vector<16x32xf32>
    %31 = arith.addf %28, %30 : vector<16x32xf32>
    %c0_16 = arith.constant 0 : index
    %c0_17 = arith.constant 0 : index
    %32 = vector.load %arg7[%c0_16, %c0_17] : memref<16x32xf32, #tpu.memory_space<vmem>>, vector<16x32xf32>
    tpu.vector_store %arg7[%c0_16, %c0_17], %31 {strides = array<i32>} : memref<16x32xf32, #tpu.memory_space<vmem>>, vector<16x32xf32>,
    return
  }
  func.func @transform_0(%arg0: i32) -> (i32, i32) {
    %c0_i32 = arith.constant 0 : i32
    %c0_i32_0 = arith.constant 0 : i32
    return %arg0, %c0_i32 : i32, i32
  }
  func.func @transform_1(%arg0: i32) -> (i32, i32) {
    %c0_i32 = arith.constant 0 : i32
    %c0_i32_0 = arith.constant 0 : i32
    %c0_i32_1 = arith.constant 0 : i32
    return %c0_i32, %c0_i32_0 : i32, i32
  }
  func.func @transform_2(%arg0: i32) -> (i32, i32) {
    %c0_i32 = arith.constant 0 : i32
    %c0_i32_0 = arith.constant 0 : i32
    %c0_i32_1 = arith.constant 0 : i32
    return %c0_i32, %c0_i32_0 : i32, i32
  }
  func.func @transform_3(%arg0: i32) -> (i32, i32) {
    %c0_i32 = arith.constant 0 : i32
    %c0_i32_0 = arith.constant 0 : i32
    return %arg0, %c0_i32 : i32, i32
  }
  func.func @transform_4(%arg0: i32) -> (i32, i32) {
    %c0_i32 = arith.constant 0 : i32
    %c0_i32_0 = arith.constant 0 : i32
    %c0_i32_1 = arith.constant 0 : i32
    return %c0_i32, %c0_i32_0 : i32, i32
  }
  func.func @transform_5(%arg0: i32) -> (i32, i32) {
    %c0_i32 = arith.constant 0 : i32
    %c0_i32_0 = arith.constant 0 : i32
    %c0_i32_1 = arith.constant 0 : i32
    return %c0_i32, %c0_i32_0 : i32, i32
  }
  func.func @transform_6(%arg0: i32) -> (i32, i32) {
    %c0_i32 = arith.constant 0 : i32
    %c0_i32_0 = arith.constant 0 : i32
    return %arg0, %c0_i32 : i32, i32
  }
}

</mosaic_0001>

<llo_original>
// kernel: bert_layer_forward.5
$region0: #{bert_layer_forward.5}
  #allocation0 [shape = 'u32[]', space=smem, size = 0x4, offset = 0x4, fixed_abs, tag = 'smem constant byte address 0x4 - core index']
  #allocation1 [shape = 'u32[144,128]{1,0:T(1,128)}', space=vmem, size = 0x12000, scoped, tag = 'internal scratch']
  %s0 = inlined_call_operand.vmem [shape: f32[16,32], index: 0, kind: input, shape index: {}]
  %s1 = inlined_call_operand.vmem [shape: f32[32,96], index: 1, kind: input, shape index: {}]
  %s2 = inlined_call_operand.vmem [shape: f32[1,96], index: 2, kind: input, shape index: {}]
  %s3 = inlined_call_operand.vmem [shape: f32[16,96], index: 3, kind: output, shape index: {}]
  %s4 = sld [smem:[#allocation0]]
  $region22: #{bert_layer_forward.5} parent=0
    _
  %s6 = ssub.s32 1, %s4
  %s7 = scalar_select 0, %s6, %s4
  // Predicated region
  $region2: #{bert_layer_forward.5} parent=0 // pred_check
    _
  $region3: #{bert_layer_forward.5} parent=0 // pred_check_branch
    %9 = sbr.rel (0) target = $region5
  $region4: #{bert_layer_forward.5} parent=0 // pred_region
    _
  $region5: #{bert_layer_forward.5} parent=0 // pred_fallthru
    _
  // Predicated region
  $region6: #{bert_layer_forward.5} parent=0 // pred_check
    _
  $region7: #{bert_layer_forward.5} parent=0 // pred_check_branch
    %11 = sbr.rel (0) target = $region9
  $region8: #{bert_layer_forward.5} parent=0 // pred_region
    _
  $region9: #{bert_layer_forward.5} parent=0 // pred_fallthru
    _
  // Predicated region
  $region10: #{bert_layer_forward.5} parent=0 // pred_check
    _
  $region11: #{bert_layer_forward.5} parent=0 // pred_check_branch
    %13 = sbr.rel (0) target = $region13
  $region12: #{bert_layer_forward.5} parent=0 // pred_region
    _
  $region13: #{bert_layer_forward.5} parent=0 // pred_fallthru
    _
  %v14 = vld [vmem:[%s0] sm:$0xff]
  %v15 = vld [vmem:[%s0 + $0x8] sm:$0xff]
  %v16 = vld [vmem:[%s1] sm:$0xff]
  %v17 = vld [vmem:[%s1 + $0x8] sm:$0xff]
  %v18 = vld [vmem:[%s1 + $0x10] sm:$0xff]
  %v19 = vld [vmem:[%s1 + $0x18] sm:$0xff]
  %v20 = vld [vmem:[%s2] sm:$0x1]
  %v22 = vlaneseq
  %v23 = vshrl.u32 %v22, 7
  %v24 = vsub.s32 0, %v23
  %v25 = vrot.slane %v20, %v24
  %vm27 = vcmask 261120
  %v29 = vsel %vm27, %v14, 0
  %v32 = vsel %vm27, %v15, 0
  %34 = vmatprep.subr.mxu0 0.0
  %35 = vmatpush1.msra.mxu0 %v16
  %36 = vmatprep.subr.mxu0 0.0
  %37 = vmatpush1.msra.mxu0 %v17
  %38 = vmatprep.subr.mxu0 0.0
  %39 = vmatpush1.msra.mxu0 %v18
  %40 = vmatprep.subr.mxu0 0.0
  %41 = vmatpush1.msra.mxu0 %v19
  %42 = vmatprep.subr.mxu0 0.0
  %43 = vmatpush1.msra.mxu0 0.0
  %44 = vmatprep.subr.mxu0 0.0
  %45 = vmatpush1.msra.mxu0 0.0
  %46 = vmatprep.subr.mxu0 0.0
  %47 = vmatpush1.msra.mxu0 0.0
  %48 = vmatprep.subr.mxu0 0.0
  %49 = vmatpush1.msra.mxu0 0.0
  %50 = vmatprep.subr.mxu0 0.0
  %51 = vmatpush1.msra.mxu0 0.0
  %52 = vmatprep.subr.mxu0 0.0
  %53 = vmatpush1.msra.mxu0 0.0
  %54 = vmatprep.subr.mxu0 0.0
  %55 = vmatpush1.msra.mxu0 0.0
  %56 = vmatprep.subr.mxu0 0.0
  %57 = vmatpush1.msra.mxu0 0.0
  %58 = vmatprep.subr.mxu0 0.0
  %59 = vmatpush1.msra.mxu0 0.0
  %60 = vmatprep.subr.mxu0 0.0
  %61 = vmatpush1.msra.mxu0 0.0
  %62 = vmatprep.subr.mxu0 0.0
  %63 = vmatpush1.msra.mxu0 0.0
  %64 = vmatprep.subr.mxu0 0.0
  %65 = vmatpush1.msra.mxu0 0.0
  %66 = vmatprep.subr.mxu0 0.0
  %67 = vmatpush1.msra.mxu0 0.0
  %68 = vmatprep.subr.mxu0 0.0
  %69 = vmatpush1.msra.mxu0 0.0
  %70 = vmatprep.subr.mxu0 0.0
  %71 = vmatpush1.msra.mxu0 0.0
  %72 = vmatprep.subr.mxu0 0.0
  %73 = vmatpush1.msra.mxu0 0.0
  %74 = vmatprep.subr.mxu0 0.0
  %75 = vmatpush1.msra.mxu0 0.0
  %76 = vmatprep.subr.mxu0 0.0
  %77 = vmatpush1.msra.mxu0 0.0
  %78 = vmatprep.subr.mxu0 0.0
  %79 = vmatpush1.msra.mxu0 0.0
  %80 = vmatprep.subr.mxu0 0.0
  %81 = vmatpush1.msra.mxu0 0.0
  %82 = vmatprep.subr.mxu0 0.0
  %83 = vmatpush1.msra.mxu0 0.0
  %84 = vmatprep.subr.mxu0 0.0
  %85 = vmatpush1.msra.mxu0 0.0
  %86 = vmatprep.subr.mxu0 0.0
  %87 = vmatpush1.msra.mxu0 0.0
  %88 = vmatprep.subr.mxu0 0.0
  %89 = vmatpush1.msra.mxu0 0.0
  %90 = vmatprep.subr.mxu0 0.0
  %91 = vmatpush1.msra.mxu0 0.0
  %92 = vmatprep.subr.mxu0 0.0
  %93 = vmatpush1.msra.mxu0 0.0
  %94 = vmatprep.subr.mxu0 0.0
  %95 = vmatpush1.msra.mxu0 0.0
  %96 = vmatprep.subr.mxu0 0.0
  %97 = vmatpush1.msra.mxu0 0.0
  %98 = vmatprep.mubr.f32.mxu0 0.0
  %99 = vmatmul.mubr.f32.gmra.mrb[0].mxu0 %v29
  %v100 = vpop.f32.mrb[0].mxu0
  %v101 = vadd.f32 %v25, %v100
  %v102 = vpop.f32.mrb[0].mxu0
  %103 = vmatprep.mubr.f32.mxu0 0.0
  %104 = vmatmul.mubr.f32.gmra.mrb[0].mxu0 %v32
  %v105 = vpop.f32.mrb[0].mxu0
  %v106 = vadd.f32 %v25, %v105
  %v107 = vpop.f32.mrb[0].mxu0
  %108 = vdwg.mxu0
  %vm109 = vcmask 785408
  %110 = vst.msk [vmem:[%s3] sm:$0xff] %vm109, %v101
  %111 = vst.msk [vmem:[%s3 + $0x8] sm:$0xff] %vm109, %v106
  // Predicated region
  $region14: #{bert_layer_forward.5} parent=0 // pred_check
    _
  $region15: #{bert_layer_forward.5} parent=0 // pred_check_branch
    %113 = sbr.rel (0) target = $region17
  $region16: #{bert_layer_forward.5} parent=0 // pred_region
    _
  $region17: #{bert_layer_forward.5} parent=0 // pred_fallthru
    _
  // Predicated region
  $region18: #{bert_layer_forward.5} parent=0 // pred_check
    _
  $region19: #{bert_layer_forward.5} parent=0 // pred_check_branch
    %115 = sbr.rel (0) target = $region21
  $region20: #{bert_layer_forward.5} parent=0 // pred_region
    _
  $region21: #{bert_layer_forward.5} parent=0 // pred_fallthru
    _

// kernel: bert_layer_forward.6
$region0: #{bert_layer_forward.6}
  #allocation0 [shape = 'u32[]', space=smem, size = 0x4, offset = 0x4, fixed_abs, tag = 'smem constant byte address 0x4 - core index']
  #allocation1 [shape = 'u32[144,128]{1,0:T(1,128)}', space=vmem, size = 0x12000, scoped, tag = 'internal scratch']
  %s0 = inlined_call_operand.vmem [shape: f32[8,8,8], index: 0, kind: input, shape index: {}]
  %s1 = inlined_call_operand.vmem [shape: f32[8,8,8], index: 1, kind: input, shape index: {}]
  %s2 = inlined_call_operand.vmem [shape: f32[8,8,8], index: 2, kind: input, shape index: {}]
  %s3 = inlined_call_operand.vmem [shape: f32[8,1,8], index: 3, kind: input, shape index: {}]
  %s4 = inlined_call_operand.vmem [shape: f32[8,8,8], index: 4, kind: output, shape index: {}]
  %s5 = sld [smem:[#allocation0]]
  $region49: #{bert_layer_forward.6} parent=0
    _
  %s7 = ssub.s32 1, %s5
  %s8 = scalar_select 0, %s7, %s5
  loop: start=0, step=1, limit=10
  $region2: #{bert_layer_forward.6} parent=0 // loop_pre_header
    _
  $region3: #{bert_layer_forward.6} parent=0 // loop_header
    %s10 = sphi 0, %s14
    %p11 = scmp.ge.s32.totalorder %s10, 10
    %s20 = sphi 0, %s22
    %s23 = sphi 0, %s20
    %s24 = sphi 0, %s23
    %s40 = sphi 0, %s24
    %s46 = sphi 0, %s48
    %s49 = sphi 0, %s46
    %s50 = sphi 0, %s49
    %s66 = sphi 0, %s50
    %s72 = sphi 0, %s74
    %s75 = sphi 0, %s72
    %s76 = sphi 0, %s75
    %s92 = sphi 0, %s76
    %s98 = sphi 0, %s100
    %s101 = sphi 0, %s98
    %s102 = sphi 0, %s101
    %s118 = sphi 0, %s102
    %s124 = sphi 0, %s126
    %s127 = sphi 0, %s124
    %s128 = sphi 0, %s127
    %s144 = sphi 0, %s128
  $region4: #{bert_layer_forward.6} parent=0 // loop_header_branch
    %13 = sbr.rel (%p11) target = $region8
  $region5: #{bert_layer_forward.6} parent=0 // loop_body
    %s15 = ssub.s32 %s10, 1
    %s16 = ssub.s32 %s10, 2
    %s17 = sadd.s32 %s10, 1
    %s18 = ssub.s32 %s10, %s17
    %p19 = scmp.eq.s32.totalorder %s18, 0
    %s21 = sadd.s32 %s20, 1
    %s22 = scalar_select %p19, %s20, %s21
    %p25 = pneg %p19
    %p26 = scmp.eq.s32.totalorder %s10, 7
    %p27 = por %p25, %p26
    %p28 = scmp.ne.s32.totalorder %s20, %s23
    %p29 = scmp.eq.s32.totalorder %s10, 0
    %p30 = por %p28, %p29
    %p31 = scmp.ne.s32.totalorder %s20, %s23
    %p32 = scmp.eq.s32.totalorder %s15, 7
    %p33 = por %p31, %p32
    %p34 = scmp.ne.s32.totalorder %s23, %s24
    %p35 = scmp.eq.s32.totalorder %s15, 0
    %p36 = por %p34, %p35
    %p37 = scmp.ne.s32.totalorder %s23, %s24
    %p38 = scmp.eq.s32.totalorder %s16, 7
    %p39 = por %p37, %p38
    %p41 = scmp.ne.s32.totalorder %s24, %s40
    %p42 = scmp.eq.s32.totalorder %s16, 0
    %p43 = por %p41, %p42
    %s44 = ssub.s32 %s10, %s17
    %p45 = scmp.eq.s32.totalorder %s44, 0
    %s47 = sadd.s32 %s46, 1
    %s48 = scalar_select %p45, %s46, %s47
    %p51 = pneg %p45
    %p52 = scmp.eq.s32.totalorder %s10, 7
    %p53 = por %p51, %p52
    %p54 = scmp.ne.s32.totalorder %s46, %s49
    %p55 = scmp.eq.s32.totalorder %s10, 0
    %p56 = por %p54, %p55
    %p57 = scmp.ne.s32.totalorder %s46, %s49
    %p58 = scmp.eq.s32.totalorder %s15, 7
    %p59 = por %p57, %p58
    %p60 = scmp.ne.s32.totalorder %s49, %s50
    %p61 = scmp.eq.s32.totalorder %s15, 0
    %p62 = por %p60, %p61
    %p63 = scmp.ne.s32.totalorder %s49, %s50
    %p64 = scmp.eq.s32.totalorder %s16, 7
    %p65 = por %p63, %p64
    %p67 = scmp.ne.s32.totalorder %s50, %s66
    %p68 = scmp.eq.s32.totalorder %s16, 0
    %p69 = por %p67, %p68
    %s70 = ssub.s32 %s10, %s17
    %p71 = scmp.eq.s32.totalorder %s70, 0
    %s73 = sadd.s32 %s72, 1
    %s74 = scalar_select %p71, %s72, %s73
    %p77 = pneg %p71
    %p78 = scmp.eq.s32.totalorder %s10, 7
    %p79 = por %p77, %p78
    %p80 = scmp.ne.s32.totalorder %s72, %s75
    %p81 = scmp.eq.s32.totalorder %s10, 0
    %p82 = por %p80, %p81
    %p83 = scmp.ne.s32.totalorder %s72, %s75
    %p84 = scmp.eq.s32.totalorder %s15, 7
    %p85 = por %p83, %p84
    %p86 = scmp.ne.s32.totalorder %s75, %s76
    %p87 = scmp.eq.s32.totalorder %s15, 0
    %p88 = por %p86, %p87
    %p89 = scmp.ne.s32.totalorder %s75, %s76
    %p90 = scmp.eq.s32.totalorder %s16, 7
    %p91 = por %p89, %p90
    %p93 = scmp.ne.s32.totalorder %s76, %s92
    %p94 = scmp.eq.s32.totalorder %s16, 0
    %p95 = por %p93, %p94
    %s96 = ssub.s32 %s10, %s17
    %p97 = scmp.eq.s32.totalorder %s96, 0
    %s99 = sadd.s32 %s98, 1
    %s100 = scalar_select %p97, %s98, %s99
    %p103 = pneg %p97
    %p104 = scmp.eq.s32.totalorder %s10, 7
    %p105 = por %p103, %p104
    %p106 = scmp.ne.s32.totalorder %s98, %s101
    %p107 = scmp.eq.s32.totalorder %s10, 0
    %p108 = por %p106, %p107
    %p109 = scmp.ne.s32.totalorder %s98, %s101
    %p110 = scmp.eq.s32.totalorder %s15, 7
    %p111 = por %p109, %p110
    %p112 = scmp.ne.s32.totalorder %s101, %s102
    %p113 = scmp.eq.s32.totalorder %s15, 0
    %p114 = por %p112, %p113
    %p115 = scmp.ne.s32.totalorder %s101, %s102
    %p116 = scmp.eq.s32.totalorder %s16, 7
    %p117 = por %p115, %p116
    %p119 = scmp.ne.s32.totalorder %s102, %s118
    %p120 = scmp.eq.s32.totalorder %s16, 0
    %p121 = por %p119, %p120
    %s122 = ssub.s32 %s10, %s17
    %p123 = scmp.eq.s32.totalorder %s122, 0
    %s125 = sadd.s32 %s124, 1
    %s126 = scalar_select %p123, %s124, %s125
    %p129 = pneg %p123
    %p130 = scmp.eq.s32.totalorder %s10, 7
    %p131 = por %p129, %p130
    %p132 = scmp.ne.s32.totalorder %s124, %s127
    %p133 = scmp.eq.s32.totalorder %s10, 0
    %p134 = por %p132, %p133
    %p135 = scmp.ne.s32.totalorder %s124, %s127
    %p136 = scmp.eq.s32.totalorder %s15, 7
    %p137 = por %p135, %p136
    %p138 = scmp.ne.s32.totalorder %s127, %s128
    %p139 = scmp.eq.s32.totalorder %s15, 0
    %p140 = por %p138, %p139
    %p141 = scmp.ne.s32.totalorder %s127, %s128
    %p142 = scmp.eq.s32.totalorder %s16, 7
    %p143 = por %p141, %p142
    %p145 = scmp.ne.s32.totalorder %s128, %s144
    %p146 = scmp.eq.s32.totalorder %s16, 0
    %p147 = por %p145, %p146
    %p148 = scmp.le.s32.totalorder 1, %s10
    %p149 = scmp.lt.s32.totalorder %s10, 9
    %p150 = pnand %p148, %p149
    %p151 = pneg %p150
    // Predicated region
    $region9: #{bert_layer_forward.6} parent=5 // pred_check
      _
    $region10: #{bert_layer_forward.6} parent=5 // pred_check_branch
      %153 = sbr.rel (%p150) target = $region12
    $region11: #{bert_layer_forward.6} parent=5 // pred_region
      %s154 = ssub.s32 %s10, 1
    $region12: #{bert_layer_forward.6} parent=5 // pred_fallthru
      _
    %p155 = scmp.lt.s32.totalorder %s10, 8
    // Predicated region
    $region13: #{bert_layer_forward.6} parent=5 // pred_check
      %p156 = pneg %p155
    $region14: #{bert_layer_forward.6} parent=5 // pred_check_branch
      %158 = sbr.rel (%p156) target = $region16
    $region15: #{bert_layer_forward.6} parent=5 // pred_region
      // Predicated region
      $region17: #{bert_layer_forward.6} parent=15 // pred_check
        %p159 = pneg %p30
      $region18: #{bert_layer_forward.6} parent=15 // pred_check_branch
        %161 = sbr.rel (%p159) target = $region20
      $region19: #{bert_layer_forward.6} parent=15 // pred_region
        %p162 = scmp.lt.s32.totalorder %s10, 7
        %s163 = scalar_select %p162, %s10, 7
        %s164 = smul.addr %s163, 8
        %s165 = scalar_lea.vmem %s0, %s164
      $region20: #{bert_layer_forward.6} parent=15 // pred_fallthru
        _
      // Predicated region
      $region21: #{bert_layer_forward.6} parent=15 // pred_check
        %p166 = pneg %p56
      $region22: #{bert_layer_forward.6} parent=15 // pred_check_branch
        %168 = sbr.rel (%p166) target = $region24
      $region23: #{bert_layer_forward.6} parent=15 // pred_region
        %p169 = scmp.lt.s32.totalorder %s10, 7
        %s170 = scalar_select %p169, %s10, 7
        %s171 = smul.addr %s170, 8
        %s172 = scalar_lea.vmem %s1, %s171
      $region24: #{bert_layer_forward.6} parent=15 // pred_fallthru
        _
      // Predicated region
      $region25: #{bert_layer_forward.6} parent=15 // pred_check
        %p173 = pneg %p82
      $region26: #{bert_layer_forward.6} parent=15 // pred_check_branch
        %175 = sbr.rel (%p173) target = $region28
      $region27: #{bert_layer_forward.6} parent=15 // pred_region
        %p176 = scmp.lt.s32.totalorder %s10, 7
        %s177 = scalar_select %p176, %s10, 7
        %s178 = smul.addr %s177, 8
        %s179 = scalar_lea.vmem %s2, %s178
      $region28: #{bert_layer_forward.6} parent=15 // pred_fallthru
        _
      // Predicated region
      $region29: #{bert_layer_forward.6} parent=15 // pred_check
        %p180 = pneg %p108
      $region30: #{bert_layer_forward.6} parent=15 // pred_check_branch
        %182 = sbr.rel (%p180) target = $region32
      $region31: #{bert_layer_forward.6} parent=15 // pred_region
        %p183 = scmp.lt.s32.totalorder %s10, 7
        %s184 = scalar_select %p183, %s10, 7
        %s185 = scalar_lea.vmem %s3, %s184
      $region32: #{bert_layer_forward.6} parent=15 // pred_fallthru
        _
    $region16: #{bert_layer_forward.6} parent=5 // pred_fallthru
      _
    %p186 = scmp.le.s32.totalorder 1, %s10
    %p187 = scmp.lt.s32.totalorder %s10, 9
    %p188 = pnand %p186, %p187
    %p189 = pneg %p188
    // Predicated region
    $region33: #{bert_layer_forward.6} parent=5 // pred_check
      _
    $region34: #{bert_layer_forward.6} parent=5 // pred_check_branch
      %191 = sbr.rel (%p188) target = $region36
    $region35: #{bert_layer_forward.6} parent=5 // pred_region
      %s192 = ssub.s32 %s10, 1
      %p193 = scmp.lt.s32.totalorder %s15, 7
      %s194 = scalar_select %p193, %s15, 7
      %s195 = smul.addr %s194, 8
      %s196 = scalar_lea.vmem %s0, %s195
      %p197 = pneg %p36
      %p198 = pneg %p33
      %p199 = scmp.lt.s32.totalorder %s15, 7
      %s200 = scalar_select %p199, %s15, 7
      %s201 = smul.addr %s200, 8
      %s202 = scalar_lea.vmem %s1, %s201
      %p203 = pneg %p62
      %p204 = pneg %p59
      %p205 = scmp.lt.s32.totalorder %s15, 7
      %s206 = scalar_select %p205, %s15, 7
      %s207 = smul.addr %s206, 8
      %s208 = scalar_lea.vmem %s2, %s207
      %p209 = pneg %p88
      %p210 = pneg %p85
      %p211 = scmp.lt.s32.totalorder %s15, 7
      %s212 = scalar_select %p211, %s15, 7
      %s213 = scalar_lea.vmem %s3, %s212
      %p214 = pneg %p114
      %p215 = pneg %p111
      %p216 = pneg %p140
      %p217 = pneg %p137
      %p218 = scmp.lt.s32.totalorder %s15, 7
      %s219 = scalar_select %p218, %s15, 7
      %s220 = smul.addr %s219, 8
      %s221 = scalar_lea.vmem %s4, %s220
      %p222 = scmp.lt.s32.totalorder %s15, 7
      %s223 = scalar_select %p222, %s15, 7
      %s224 = smul.addr %s223, 8
      %s225 = scalar_lea.vmem %s0, %s224
      %p226 = scmp.lt.s32.totalorder %s15, 7
      %s227 = scalar_select %p226, %s15, 7
      %s228 = smul.addr %s227, 8
      %s229 = scalar_lea.vmem %s1, %s228
      %p230 = scmp.lt.s32.totalorder %s15, 7
      %s231 = scalar_select %p230, %s15, 7
      %s232 = smul.addr %s231, 8
      %s233 = scalar_lea.vmem %s2, %s232
      %p234 = scmp.lt.s32.totalorder %s15, 7
      %s235 = scalar_select %p234, %s15, 7
      %s236 = scalar_lea.vmem %s3, %s235
      %p237 = scmp.lt.s32.totalorder %s15, 7
      %s238 = scalar_select %p237, %s15, 7
      %s239 = smul.addr %s238, 8
      %s240 = scalar_lea.vmem %s4, %s239
      %v241 = vld [vmem:[%s225] sm:$0xff]
      %v242 = vld [vmem:[%s229] sm:$0xff]
      %v243 = vld [vmem:[%s233] sm:$0xff]
      %vm244 = vcmask 64512
      %v246 = vsel %vm244, %v241, 0
      %v249 = vsel %vm244, %v242, 0
      %251 = vmatprep.subr.mxu0 0.0
      %252 = vmatpush1.xpose.msra.mxu0 %v249
      %253 = vmatprep.subr.mxu0 0.0
      %254 = vmatpush1.xpose.msra.mxu0 0.0
      %255 = vmatprep.subr.mxu0 0.0
      %256 = vmatpush1.xpose.msra.mxu0 0.0
      %257 = vmatprep.subr.mxu0 0.0
      %258 = vmatpush1.xpose.msra.mxu0 0.0
      %259 = vmatprep.subr.mxu0 0.0
      %260 = vmatpush1.xpose.msra.mxu0 0.0
      %261 = vmatprep.subr.mxu0 0.0
      %262 = vmatpush1.xpose.msra.mxu0 0.0
      %263 = vmatprep.subr.mxu0 0.0
      %264 = vmatpush1.xpose.msra.mxu0 0.0
      %265 = vmatprep.subr.mxu0 0.0
      %266 = vmatpush1.xpose.msra.mxu0 0.0
      %267 = vmatprep.subr.mxu0 0.0
      %268 = vmatpush1.xpose.msra.mxu0 0.0
      %269 = vmatprep.subr.mxu0 0.0
      %270 = vmatpush1.xpose.msra.mxu0 0.0
      %271 = vmatprep.subr.mxu0 0.0
      %272 = vmatpush1.xpose.msra.mxu0 0.0
      %273 = vmatprep.subr.mxu0 0.0
      %274 = vmatpush1.xpose.msra.mxu0 0.0
      %275 = vmatprep.subr.mxu0 0.0
      %276 = vmatpush1.xpose.msra.mxu0 0.0
      %277 = vmatprep.subr.mxu0 0.0
      %278 = vmatpush1.xpose.msra.mxu0 0.0
      %279 = vmatprep.subr.mxu0 0.0
      %280 = vmatpush1.xpose.msra.mxu0 0.0
      %281 = vmatprep.subr.mxu0 0.0
      %282 = vmatpush1.xpose.msra.mxu0 0.0
      %283 = vmatprep.subr.mxu0 0.0
      %284 = vmatpush1.xpose.msra.mxu0 0.0
      %285 = vmatprep.subr.mxu0 0.0
      %286 = vmatpush1.xpose.msra.mxu0 0.0
      %287 = vmatprep.subr.mxu0 0.0
      %288 = vmatpush1.xpose.msra.mxu0 0.0
      %289 = vmatprep.subr.mxu0 0.0
      %290 = vmatpush1.xpose.msra.mxu0 0.0
      %291 = vmatprep.subr.mxu0 0.0
      %292 = vmatpush1.xpose.msra.mxu0 0.0
      %293 = vmatprep.subr.mxu0 0.0
      %294 = vmatpush1.xpose.msra.mxu0 0.0
      %295 = vmatprep.subr.mxu0 0.0
      %296 = vmatpush1.xpose.msra.mxu0 0.0
      %297 = vmatprep.subr.mxu0 0.0
      %298 = vmatpush1.xpose.msra.mxu0 0.0
      %299 = vmatprep.subr.mxu0 0.0
      %300 = vmatpush1.xpose.msra.mxu0 0.0
      %301 = vmatprep.subr.mxu0 0.0
      %302 = vmatpush1.xpose.msra.mxu0 0.0
      %303 = vmatprep.subr.mxu0 0.0
      %304 = vmatpush1.xpose.msra.mxu0 0.0
      %305 = vmatprep.subr.mxu0 0.0
      %306 = vmatpush1.xpose.msra.mxu0 0.0
      %307 = vmatprep.subr.mxu0 0.0
      %308 = vmatpush1.xpose.msra.mxu0 0.0
      %309 = vmatprep.subr.mxu0 0.0
      %310 = vmatpush1.xpose.msra.mxu0 0.0
      %311 = vmatprep.subr.mxu0 0.0
      %312 = vmatpush1.xpose.msra.mxu0 0.0
      %313 = vmatprep.subr.mxu0 0.0
      %314 = vmatpush1.xpose.msra.mxu0 0.0
      %315 = vmatprep.mubr.f32.mxu0 0.0
      %316 = vmatmul.mubr.f32.gmra.mrb[0].mxu0 %v246
      %v317 = vpop.f32.mrb[0].mxu0
      %v318 = vadd.f32 0.0, %v317
      %v319 = vpop.f32.mrb[0].mxu0
      %320 = vdwg.mxu0
      %v321 = vmul.f32 %v318, 0.35355338
      %v322 = vld [vmem:[%s236] sm:$0x1]
      %v324 = vlaneseq
      %v325 = vshrl.u32 %v324, 7
      %v326 = vsub.s32 0, %v325
      %v327 = vrot.slane %v322, %v326
      %v329 = vadd.f32 %v321, %v327
      %v330 = vsel %vm244, %v329, -inf
      %331 = vmax.xlane.f32.xlu0 %v330
      %v332 = vpop.xlane.xlu0 %331
      %v333 = vsub.f32 %v329, %v332
      %v334 = vmul.f32 %v333, 1.442695
      %v335 = vpow.pop %v334
      %v336 = vsel %vm244, %v335, 0.0
      %337 = vadd.xlane.f32.xlu0 %v336
      %v338 = vpop.xlane.xlu0 %337
      %v339 = vrcp.pop %v338
      %v340 = vmul.f32 %v335, %v339
      %v342 = vsel %vm244, %v340, 0
      %344 = vmatprep.subr.mxu0 0.0
      %345 = vmatpush1.msra.mxu0 %v243
      %346 = vmatprep.subr.mxu0 0.0
      %347 = vmatpush1.msra.mxu0 0.0
      %348 = vmatprep.subr.mxu0 0.0
      %349 = vmatpush1.msra.mxu0 0.0
      %350 = vmatprep.subr.mxu0 0.0
      %351 = vmatpush1.msra.mxu0 0.0
      %352 = vmatprep.subr.mxu0 0.0
      %353 = vmatpush1.msra.mxu0 0.0
      %354 = vmatprep.subr.mxu0 0.0
      %355 = vmatpush1.msra.mxu0 0.0
      %356 = vmatprep.subr.mxu0 0.0
      %357 = vmatpush1.msra.mxu0 0.0
      %358 = vmatprep.subr.mxu0 0.0
      %359 = vmatpush1.msra.mxu0 0.0
      %360 = vmatprep.subr.mxu0 0.0
      %361 = vmatpush1.msra.mxu0 0.0
      %362 = vmatprep.subr.mxu0 0.0
      %363 = vmatpush1.msra.mxu0 0.0
      %364 = vmatprep.subr.mxu0 0.0
      %365 = vmatpush1.msra.mxu0 0.0
      %366 = vmatprep.subr.mxu0 0.0
      %367 = vmatpush1.msra.mxu0 0.0
      %368 = vmatprep.subr.mxu0 0.0
      %369 = vmatpush1.msra.mxu0 0.0
      %370 = vmatprep.subr.mxu0 0.0
      %371 = vmatpush1.msra.mxu0 0.0
      %372 = vmatprep.subr.mxu0 0.0
      %373 = vmatpush1.msra.mxu0 0.0
      %374 = vmatprep.subr.mxu0 0.0
      %375 = vmatpush1.msra.mxu0 0.0
      %376 = vmatprep.subr.mxu0 0.0
      %377 = vmatpush1.msra.mxu0 0.0
      %378 = vmatprep.subr.mxu0 0.0
      %379 = vmatpush1.msra.mxu0 0.0
      %380 = vmatprep.subr.mxu0 0.0
      %381 = vmatpush1.msra.mxu0 0.0
      %382 = vmatprep.subr.mxu0 0.0
      %383 = vmatpush1.msra.mxu0 0.0
      %384 = vmatprep.subr.mxu0 0.0
      %385 = vmatpush1.msra.mxu0 0.0
      %386 = vmatprep.subr.mxu0 0.0
      %387 = vmatpush1.msra.mxu0 0.0
      %388 = vmatprep.subr.mxu0 0.0
      %389 = vmatpush1.msra.mxu0 0.0
      %390 = vmatprep.subr.mxu0 0.0
      %391 = vmatpush1.msra.mxu0 0.0
      %392 = vmatprep.subr.mxu0 0.0
      %393 = vmatpush1.msra.mxu0 0.0
      %394 = vmatprep.subr.mxu0 0.0
      %395 = vmatpush1.msra.mxu0 0.0
      %396 = vmatprep.subr.mxu0 0.0
      %397 = vmatpush1.msra.mxu0 0.0
      %398 = vmatprep.subr.mxu0 0.0
      %399 = vmatpush1.msra.mxu0 0.0
      %400 = vmatprep.subr.mxu0 0.0
      %401 = vmatpush1.msra.mxu0 0.0
      %402 = vmatprep.subr.mxu0 0.0
      %403 = vmatpush1.msra.mxu0 0.0
      %404 = vmatprep.subr.mxu0 0.0
      %405 = vmatpush1.msra.mxu0 0.0
      %406 = vmatprep.subr.mxu0 0.0
      %407 = vmatpush1.msra.mxu0 0.0
      %408 = vmatprep.mubr.f32.mxu0 0.0
      %409 = vmatmul.mubr.f32.gmra.mrb[0].mxu0 %v342
      %v410 = vpop.f32.mrb[0].mxu0
      %v411 = vadd.f32 0.0, %v410
      %v412 = vpop.f32.mrb[0].mxu0
      %413 = vdwg.mxu0
      %414 = vst.msk [vmem:[%s240] sm:$0xff] %vm244, %v411
      %p415 = scmp.lt.s32.totalorder %s15, 7
      %s416 = scalar_select %p415, %s15, 7
      %s417 = smul.addr %s416, 8
      %s418 = scalar_lea.vmem %s4, %s417
      // Predicated region
      $region37: #{bert_layer_forward.6} parent=35 // pred_check
        %p419 = pneg %p137
      $region38: #{bert_layer_forward.6} parent=35 // pred_check_branch
        %421 = sbr.rel (%p419) target = $region40
      $region39: #{bert_layer_forward.6} parent=35 // pred_region
        _
      $region40: #{bert_layer_forward.6} parent=35 // pred_fallthru
        _
    $region36: #{bert_layer_forward.6} parent=5 // pred_fallthru
      _
    %p422 = scmp.le.s32.totalorder 2, %s10
    // Predicated region
    $region41: #{bert_layer_forward.6} parent=5 // pred_check
      %p423 = pneg %p422
    $region42: #{bert_layer_forward.6} parent=5 // pred_check_branch
      %425 = sbr.rel (%p423) target = $region44
    $region43: #{bert_layer_forward.6} parent=5 // pred_region
      %s426 = ssub.s32 %s10, 2
      // Predicated region
      $region45: #{bert_layer_forward.6} parent=43 // pred_check
        %p427 = pneg %p143
      $region46: #{bert_layer_forward.6} parent=43 // pred_check_branch
        %429 = sbr.rel (%p427) target = $region48
      $region47: #{bert_layer_forward.6} parent=43 // pred_region
        %p430 = scmp.lt.s32.totalorder %s16, 7
        %s431 = scalar_select %p430, %s16, 7
        %s432 = smul.addr %s431, 8
        %s433 = scalar_lea.vmem %s4, %s432
      $region48: #{bert_layer_forward.6} parent=43 // pred_fallthru
        _
    $region44: #{bert_layer_forward.6} parent=5 // pred_fallthru
      _
  $region6: #{bert_layer_forward.6} parent=0 // loop_footer
    %s14 = sadd.s32 1, %s10
  $region7: #{bert_layer_forward.6} parent=0 // loop_footer_branch
    %9 = sbr.rel target = $region3
  $region8: #{bert_layer_forward.6} parent=0 // loop_exit
    _

// kernel: bert_layer_forward.7
$region0: #{bert_layer_forward.7}
  #allocation0 [shape = 'u32[]', space=smem, size = 0x4, offset = 0x4, fixed_abs, tag = 'smem constant byte address 0x4 - core index']
  #allocation1 [shape = 'u32[144,128]{1,0:T(1,128)}', space=vmem, size = 0x12000, scoped, tag = 'internal scratch']
  %s0 = inlined_call_operand.vmem [shape: f32[16,32], index: 0, kind: input, shape index: {}]
  %s1 = inlined_call_operand.vmem [shape: f32[32,32], index: 1, kind: input, shape index: {}]
  %s2 = inlined_call_operand.vmem [shape: f32[1,32], index: 2, kind: input, shape index: {}]
  %s3 = inlined_call_operand.vmem [shape: f32[16,32], index: 3, kind: input, shape index: {}]
  %s4 = inlined_call_operand.vmem [shape: f32[1,32], index: 4, kind: input, shape index: {}]
  %s5 = inlined_call_operand.vmem [shape: f32[1,32], index: 5, kind: input, shape index: {}]
  %s6 = inlined_call_operand.vmem [shape: f32[16,32], index: 6, kind: output, shape index: {}]
  %s7 = sld [smem:[#allocation0]]
  $region34: #{bert_layer_forward.7} parent=0
    _
  %s9 = ssub.s32 1, %s7
  %s10 = scalar_select 0, %s9, %s7
  // Predicated region
  $region2: #{bert_layer_forward.7} parent=0 // pred_check
    _
  $region3: #{bert_layer_forward.7} parent=0 // pred_check_branch
    %12 = sbr.rel (0) target = $region5
  $region4: #{bert_layer_forward.7} parent=0 // pred_region
    _
  $region5: #{bert_layer_forward.7} parent=0 // pred_fallthru
    _
  // Predicated region
  $region6: #{bert_layer_forward.7} parent=0 // pred_check
    _
  $region7: #{bert_layer_forward.7} parent=0 // pred_check_branch
    %14 = sbr.rel (0) target = $region9
  $region8: #{bert_layer_forward.7} parent=0 // pred_region
    _
  $region9: #{bert_layer_forward.7} parent=0 // pred_fallthru
    _
  // Predicated region
  $region10: #{bert_layer_forward.7} parent=0 // pred_check
    _
  $region11: #{bert_layer_forward.7} parent=0 // pred_check_branch
    %16 = sbr.rel (0) target = $region13
  $region12: #{bert_layer_forward.7} parent=0 // pred_region
    _
  $region13: #{bert_layer_forward.7} parent=0 // pred_fallthru
    _
  // Predicated region
  $region14: #{bert_layer_forward.7} parent=0 // pred_check
    _
  $region15: #{bert_layer_forward.7} parent=0 // pred_check_branch
    %18 = sbr.rel (0) target = $region17
  $region16: #{bert_layer_forward.7} parent=0 // pred_region
    _
  $region17: #{bert_layer_forward.7} parent=0 // pred_fallthru
    _
  // Predicated region
  $region18: #{bert_layer_forward.7} parent=0 // pred_check
    _
  $region19: #{bert_layer_forward.7} parent=0 // pred_check_branch
    %20 = sbr.rel (0) target = $region21
  $region20: #{bert_layer_forward.7} parent=0 // pred_region
    _
  $region21: #{bert_layer_forward.7} parent=0 // pred_fallthru
    _
  // Predicated region
  $region22: #{bert_layer_forward.7} parent=0 // pred_check
    _
  $region23: #{bert_layer_forward.7} parent=0 // pred_check_branch
    %22 = sbr.rel (0) target = $region25
  $region24: #{bert_layer_forward.7} parent=0 // pred_region
    _
  $region25: #{bert_layer_forward.7} parent=0 // pred_fallthru
    _
  %v23 = vld [vmem:[%s0] sm:$0xff]
  %v24 = vld [vmem:[%s0 + $0x8] sm:$0xff]
  %v25 = vld [vmem:[%s1] sm:$0xff]
  %v26 = vld [vmem:[%s1 + $0x8] sm:$0xff]
  %v27 = vld [vmem:[%s1 + $0x10] sm:$0xff]
  %v28 = vld [vmem:[%s1 + $0x18] sm:$0xff]
  %v29 = vld [vmem:[%s2] sm:$0x1]
  %v31 = vlaneseq
  %v32 = vshrl.u32 %v31, 7
  %v33 = vsub.s32 0, %v32
  %v34 = vrot.slane %v29, %v33
  %vm36 = vcmask 261120
  %v38 = vsel %vm36, %v23, 0
  %v41 = vsel %vm36, %v24, 0
  %43 = vmatprep.subr.mxu0 0.0
  %44 = vmatpush1.msra.mxu0 %v25
  %45 = vmatprep.subr.mxu0 0.0
  %46 = vmatpush1.msra.mxu0 %v26
  %47 = vmatprep.subr.mxu0 0.0
  %48 = vmatpush1.msra.mxu0 %v27
  %49 = vmatprep.subr.mxu0 0.0
  %50 = vmatpush1.msra.mxu0 %v28
  %51 = vmatprep.subr.mxu0 0.0
  %52 = vmatpush1.msra.mxu0 0.0
  %53 = vmatprep.subr.mxu0 0.0
  %54 = vmatpush1.msra.mxu0 0.0
  %55 = vmatprep.subr.mxu0 0.0
  %56 = vmatpush1.msra.mxu0 0.0
  %57 = vmatprep.subr.mxu0 0.0
  %58 = vmatpush1.msra.mxu0 0.0
  %59 = vmatprep.subr.mxu0 0.0
  %60 = vmatpush1.msra.mxu0 0.0
  %61 = vmatprep.subr.mxu0 0.0
  %62 = vmatpush1.msra.mxu0 0.0
  %63 = vmatprep.subr.mxu0 0.0
  %64 = vmatpush1.msra.mxu0 0.0
  %65 = vmatprep.subr.mxu0 0.0
  %66 = vmatpush1.msra.mxu0 0.0
  %67 = vmatprep.subr.mxu0 0.0
  %68 = vmatpush1.msra.mxu0 0.0
  %69 = vmatprep.subr.mxu0 0.0
  %70 = vmatpush1.msra.mxu0 0.0
  %71 = vmatprep.subr.mxu0 0.0
  %72 = vmatpush1.msra.mxu0 0.0
  %73 = vmatprep.subr.mxu0 0.0
  %74 = vmatpush1.msra.mxu0 0.0
  %75 = vmatprep.subr.mxu0 0.0
  %76 = vmatpush1.msra.mxu0 0.0
  %77 = vmatprep.subr.mxu0 0.0
  %78 = vmatpush1.msra.mxu0 0.0
  %79 = vmatprep.subr.mxu0 0.0
  %80 = vmatpush1.msra.mxu0 0.0
  %81 = vmatprep.subr.mxu0 0.0
  %82 = vmatpush1.msra.mxu0 0.0
  %83 = vmatprep.subr.mxu0 0.0
  %84 = vmatpush1.msra.mxu0 0.0
  %85 = vmatprep.subr.mxu0 0.0
  %86 = vmatpush1.msra.mxu0 0.0
  %87 = vmatprep.subr.mxu0 0.0
  %88 = vmatpush1.msra.mxu0 0.0
  %89 = vmatprep.subr.mxu0 0.0
  %90 = vmatpush1.msra.mxu0 0.0
  %91 = vmatprep.subr.mxu0 0.0
  %92 = vmatpush1.msra.mxu0 0.0
  %93 = vmatprep.subr.mxu0 0.0
  %94 = vmatpush1.msra.mxu0 0.0
  %95 = vmatprep.subr.mxu0 0.0
  %96 = vmatpush1.msra.mxu0 0.0
  %97 = vmatprep.subr.mxu0 0.0
  %98 = vmatpush1.msra.mxu0 0.0
  %99 = vmatprep.subr.mxu0 0.0
  %100 = vmatpush1.msra.mxu0 0.0
  %101 = vmatprep.subr.mxu0 0.0
  %102 = vmatpush1.msra.mxu0 0.0
  %103 = vmatprep.subr.mxu0 0.0
  %104 = vmatpush1.msra.mxu0 0.0
  %105 = vmatprep.subr.mxu0 0.0
  %106 = vmatpush1.msra.mxu0 0.0
  %107 = vmatprep.mubr.f32.mxu0 0.0
  %108 = vmatmul.mubr.f32.gmra.mrb[0].mxu0 %v38
  %v109 = vpop.f32.mrb[0].mxu0
  %v110 = vadd.f32 %v34, %v109
  %v111 = vpop.f32.mrb[0].mxu0
  %112 = vmatprep.mubr.f32.mxu0 0.0
  %113 = vmatmul.mubr.f32.gmra.mrb[0].mxu0 %v41
  %v114 = vpop.f32.mrb[0].mxu0
  %v115 = vadd.f32 %v34, %v114
  %v116 = vpop.f32.mrb[0].mxu0
  %117 = vdwg.mxu0
  %v118 = vld [vmem:[%s3] sm:$0xff]
  %v119 = vld [vmem:[%s3 + $0x8] sm:$0xff]
  %v120 = vadd.f32 %v110, %v118
  %v121 = vadd.f32 %v115, %v119
  %v122 = vsel %vm36, %v120, 0.0
  %123 = vadd.xlane.f32.xlu0 %v122
  %v124 = vpop.xlane.xlu0 %123
  %v125 = vsel %vm36, %v121, 0.0
  %126 = vadd.xlane.f32.xlu0 %v125
  %v127 = vpop.xlane.xlu0 %126
  %v128 = vrcp.pop 32.0
  %v129 = vmul.f32 %v124, %v128
  %v130 = vmul.f32 %v127, %v128
  %v131 = vsub.f32 %v120, %v129
  %v132 = vsub.f32 %v121, %v130
  %v133 = vmul.f32 %v131, %v131
  %v134 = vmul.f32 %v132, %v132
  %v135 = vsel %vm36, %v133, 0.0
  %136 = vadd.xlane.f32.xlu0 %v135
  %v137 = vpop.xlane.xlu0 %136
  %v138 = vsel %vm36, %v134, 0.0
  %139 = vadd.xlane.f32.xlu0 %v138
  %v140 = vpop.xlane.xlu0 %139
  %v141 = vmul.f32 %v137, %v128
  %v142 = vmul.f32 %v140, %v128
  %v143 = vadd.f32 %v141, 1e-12
  %v144 = vadd.f32 %v142, 1e-12
  %v145 = vrsqrt.pop %v143
  %v146 = vrsqrt.pop %v144
  %v147 = vmul.f32 %v131, %v145
  %v148 = vmul.f32 %v132, %v146
  %v149 = vld [vmem:[%s4] sm:$0x1]
  %v151 = vlaneseq
  %v152 = vshrl.u32 %v151, 7
  %v153 = vsub.s32 0, %v152
  %v154 = vrot.slane %v149, %v153
  %v156 = vmul.f32 %v147, %v154
  %v157 = vmul.f32 %v148, %v154
  %v158 = vld [vmem:[%s5] sm:$0x1]
  %v160 = vlaneseq
  %v161 = vshrl.u32 %v160, 7
  %v162 = vsub.s32 0, %v161
  %v163 = vrot.slane %v158, %v162
  %v165 = vadd.f32 %v156, %v163
  %v166 = vadd.f32 %v157, %v163
  %167 = vst.msk [vmem:[%s6] sm:$0xff] %vm36, %v165
  %168 = vst.msk [vmem:[%s6 + $0x8] sm:$0xff] %vm36, %v166
  // Predicated region
  $region26: #{bert_layer_forward.7} parent=0 // pred_check
    _
  $region27: #{bert_layer_forward.7} parent=0 // pred_check_branch
    %170 = sbr.rel (0) target = $region29
  $region28: #{bert_layer_forward.7} parent=0 // pred_region
    _
  $region29: #{bert_layer_forward.7} parent=0 // pred_fallthru
    _
  // Predicated region
  $region30: #{bert_layer_forward.7} parent=0 // pred_check
    _
  $region31: #{bert_layer_forward.7} parent=0 // pred_check_branch
    %172 = sbr.rel (0) target = $region33
  $region32: #{bert_layer_forward.7} parent=0 // pred_region
    _
  $region33: #{bert_layer_forward.7} parent=0 // pred_fallthru
    _

// kernel: bert_layer_forward.8
$region0: #{bert_layer_forward.8}
  #allocation0 [shape = 'u32[]', space=smem, size = 0x4, offset = 0x4, fixed_abs, tag = 'smem constant byte address 0x4 - core index']
  #allocation1 [shape = 'u32[144,128]{1,0:T(1,128)}', space=vmem, size = 0x12000, scoped, tag = 'internal scratch']
  %s0 = inlined_call_operand.vmem [shape: f32[16,32], index: 0, kind: input, shape index: {}]
  %s1 = inlined_call_operand.vmem [shape: f32[32,128], index: 1, kind: input, shape index: {}]
  %s2 = inlined_call_operand.vmem [shape: f32[1,128], index: 2, kind: input, shape index: {}]
  %s3 = inlined_call_operand.vmem [shape: f32[16,128], index: 3, kind: output, shape index: {}]
  %s4 = sld [smem:[#allocation0]]
  $region22: #{bert_layer_forward.8} parent=0
    _
  %s6 = ssub.s32 1, %s4
  %s7 = scalar_select 0, %s6, %s4
  // Predicated region
  $region2: #{bert_layer_forward.8} parent=0 // pred_check
    _
  $region3: #{bert_layer_forward.8} parent=0 // pred_check_branch
    %9 = sbr.rel (0) target = $region5
  $region4: #{bert_layer_forward.8} parent=0 // pred_region
    _
  $region5: #{bert_layer_forward.8} parent=0 // pred_fallthru
    _
  // Predicated region
  $region6: #{bert_layer_forward.8} parent=0 // pred_check
    _
  $region7: #{bert_layer_forward.8} parent=0 // pred_check_branch
    %11 = sbr.rel (0) target = $region9
  $region8: #{bert_layer_forward.8} parent=0 // pred_region
    _
  $region9: #{bert_layer_forward.8} parent=0 // pred_fallthru
    _
  // Predicated region
  $region10: #{bert_layer_forward.8} parent=0 // pred_check
    _
  $region11: #{bert_layer_forward.8} parent=0 // pred_check_branch
    %13 = sbr.rel (0) target = $region13
  $region12: #{bert_layer_forward.8} parent=0 // pred_region
    _
  $region13: #{bert_layer_forward.8} parent=0 // pred_fallthru
    _
  %v14 = vld [vmem:[%s0] sm:$0xff]
  %v15 = vld [vmem:[%s0 + $0x8] sm:$0xff]
  %v16 = vld [vmem:[%s1] sm:$0xff]
  %v17 = vld [vmem:[%s1 + $0x8] sm:$0xff]
  %v18 = vld [vmem:[%s1 + $0x10] sm:$0xff]
  %v19 = vld [vmem:[%s1 + $0x18] sm:$0xff]
  %v20 = vld [vmem:[%s2] sm:$0x1]
  %v22 = vlaneseq
  %v23 = vshrl.u32 %v22, 7
  %v24 = vsub.s32 0, %v23
  %v25 = vrot.slane %v20, %v24
  %vm27 = vcmask 261120
  %v29 = vsel %vm27, %v14, 0
  %v32 = vsel %vm27, %v15, 0
  %34 = vmatprep.subr.mxu0 0.0
  %35 = vmatpush1.msra.mxu0 %v16
  %36 = vmatprep.subr.mxu0 0.0
  %37 = vmatpush1.msra.mxu0 %v17
  %38 = vmatprep.subr.mxu0 0.0
  %39 = vmatpush1.msra.mxu0 %v18
  %40 = vmatprep.subr.mxu0 0.0
  %41 = vmatpush1.msra.mxu0 %v19
  %42 = vmatprep.subr.mxu0 0.0
  %43 = vmatpush1.msra.mxu0 0.0
  %44 = vmatprep.subr.mxu0 0.0
  %45 = vmatpush1.msra.mxu0 0.0
  %46 = vmatprep.subr.mxu0 0.0
  %47 = vmatpush1.msra.mxu0 0.0
  %48 = vmatprep.subr.mxu0 0.0
  %49 = vmatpush1.msra.mxu0 0.0
  %50 = vmatprep.subr.mxu0 0.0
  %51 = vmatpush1.msra.mxu0 0.0
  %52 = vmatprep.subr.mxu0 0.0
  %53 = vmatpush1.msra.mxu0 0.0
  %54 = vmatprep.subr.mxu0 0.0
  %55 = vmatpush1.msra.mxu0 0.0
  %56 = vmatprep.subr.mxu0 0.0
  %57 = vmatpush1.msra.mxu0 0.0
  %58 = vmatprep.subr.mxu0 0.0
  %59 = vmatpush1.msra.mxu0 0.0
  %60 = vmatprep.subr.mxu0 0.0
  %61 = vmatpush1.msra.mxu0 0.0
  %62 = vmatprep.subr.mxu0 0.0
  %63 = vmatpush1.msra.mxu0 0.0
  %64 = vmatprep.subr.mxu0 0.0
  %65 = vmatpush1.msra.mxu0 0.0
  %66 = vmatprep.subr.mxu0 0.0
  %67 = vmatpush1.msra.mxu0 0.0
  %68 = vmatprep.subr.mxu0 0.0
  %69 = vmatpush1.msra.mxu0 0.0
  %70 = vmatprep.subr.mxu0 0.0
  %71 = vmatpush1.msra.mxu0 0.0
  %72 = vmatprep.subr.mxu0 0.0
  %73 = vmatpush1.msra.mxu0 0.0
  %74 = vmatprep.subr.mxu0 0.0
  %75 = vmatpush1.msra.mxu0 0.0
  %76 = vmatprep.subr.mxu0 0.0
  %77 = vmatpush1.msra.mxu0 0.0
  %78 = vmatprep.subr.mxu0 0.0
  %79 = vmatpush1.msra.mxu0 0.0
  %80 = vmatprep.subr.mxu0 0.0
  %81 = vmatpush1.msra.mxu0 0.0
  %82 = vmatprep.subr.mxu0 0.0
  %83 = vmatpush1.msra.mxu0 0.0
  %84 = vmatprep.subr.mxu0 0.0
  %85 = vmatpush1.msra.mxu0 0.0
  %86 = vmatprep.subr.mxu0 0.0
  %87 = vmatpush1.msra.mxu0 0.0
  %88 = vmatprep.subr.mxu0 0.0
  %89 = vmatpush1.msra.mxu0 0.0
  %90 = vmatprep.subr.mxu0 0.0
  %91 = vmatpush1.msra.mxu0 0.0
  %92 = vmatprep.subr.mxu0 0.0
  %93 = vmatpush1.msra.mxu0 0.0
  %94 = vmatprep.subr.mxu0 0.0
  %95 = vmatpush1.msra.mxu0 0.0
  %96 = vmatprep.subr.mxu0 0.0
  %97 = vmatpush1.msra.mxu0 0.0
  %98 = vmatprep.mubr.f32.mxu0 0.0
  %99 = vmatmul.mubr.f32.gmra.mrb[0].mxu0 %v29
  %v100 = vpop.f32.mrb[0].mxu0
  %v101 = vadd.f32 %v25, %v100
  %v102 = vpop.f32.mrb[0].mxu0
  %103 = vmatprep.mubr.f32.mxu0 0.0
  %104 = vmatmul.mubr.f32.gmra.mrb[0].mxu0 %v32
  %v105 = vpop.f32.mrb[0].mxu0
  %v106 = vadd.f32 %v25, %v105
  %v107 = vpop.f32.mrb[0].mxu0
  %108 = vdwg.mxu0
  %v109 = vmul.f32 %v101, 0.5
  %v110 = vmul.f32 %v106, 0.5
  %v111 = vmul.f32 %v101, 0.70710677
  %v112 = vmul.f32 %v106, 0.70710677
  %v113 = verf.f32.pop %v111
  %v114 = verf.f32.pop %v112
  %v115 = vadd.f32 %v113, 1.0
  %v116 = vadd.f32 %v114, 1.0
  %v117 = vmul.f32 %v109, %v115
  %v118 = vmul.f32 %v110, %v116
  %119 = vst [vmem:[%s3] sm:$0xff] %v117
  %120 = vst [vmem:[%s3 + $0x8] sm:$0xff] %v118
  // Predicated region
  $region14: #{bert_layer_forward.8} parent=0 // pred_check
    _
  $region15: #{bert_layer_forward.8} parent=0 // pred_check_branch
    %122 = sbr.rel (0) target = $region17
  $region16: #{bert_layer_forward.8} parent=0 // pred_region
    _
  $region17: #{bert_layer_forward.8} parent=0 // pred_fallthru
    _
  // Predicated region
  $region18: #{bert_layer_forward.8} parent=0 // pred_check
    _
  $region19: #{bert_layer_forward.8} parent=0 // pred_check_branch
    %124 = sbr.rel (0) target = $region21
  $region20: #{bert_layer_forward.8} parent=0 // pred_region
    _
  $region21: #{bert_layer_forward.8} parent=0 // pred_fallthru
    _

// kernel: bert_layer_forward.9
$region0: #{bert_layer_forward.9}
  #allocation0 [shape = 'u32[]', space=smem, size = 0x4, offset = 0x4, fixed_abs, tag = 'smem constant byte address 0x4 - core index']
  #allocation1 [shape = 'u32[144,128]{1,0:T(1,128)}', space=vmem, size = 0x12000, scoped, tag = 'internal scratch']
  %s0 = inlined_call_operand.vmem [shape: f32[16,128], index: 0, kind: input, shape index: {}]
  %s1 = inlined_call_operand.vmem [shape: f32[128,32], index: 1, kind: input, shape index: {}]
  %s2 = inlined_call_operand.vmem [shape: f32[1,32], index: 2, kind: input, shape index: {}]
  %s3 = inlined_call_operand.vmem [shape: f32[16,32], index: 3, kind: input, shape index: {}]
  %s4 = inlined_call_operand.vmem [shape: f32[1,32], index: 4, kind: input, shape index: {}]
  %s5 = inlined_call_operand.vmem [shape: f32[1,32], index: 5, kind: input, shape index: {}]
  %s6 = inlined_call_operand.hbm [shape: f32[16,32], index: 6, kind: output, shape index: {}]
  %s7 = sld [smem:[#allocation0]]
  $region34: #{bert_layer_forward.9} parent=0
    _
  %s9 = ssub.s32 1, %s7
  %s10 = scalar_select 0, %s9, %s7
  $region1: #{bert_layer_forward.9} parent=0
    #allocation2 [shape = 'u8[8192]{0}', space=vmem, size = 0x2000, scoped, tag = 'output window, operand 0, single buffered']
    #allocation3 [shape = 's32[1]{0}', space=sflag, size = 0x4, scoped, tag = 'scoped memory for bert_layer_forward.9']
    %11 = vsyncpa [#allocation3], 0
    // Predicated region
    $region2: #{bert_layer_forward.9} parent=1 // pred_check
      _
    $region3: #{bert_layer_forward.9} parent=1 // pred_check_branch
      %13 = sbr.rel (0) target = $region5
    $region4: #{bert_layer_forward.9} parent=1 // pred_region
      _
    $region5: #{bert_layer_forward.9} parent=1 // pred_fallthru
      _
    // Predicated region
    $region6: #{bert_layer_forward.9} parent=1 // pred_check
      _
    $region7: #{bert_layer_forward.9} parent=1 // pred_check_branch
      %15 = sbr.rel (0) target = $region9
    $region8: #{bert_layer_forward.9} parent=1 // pred_region
      _
    $region9: #{bert_layer_forward.9} parent=1 // pred_fallthru
      _
    // Predicated region
    $region10: #{bert_layer_forward.9} parent=1 // pred_check
      _
    $region11: #{bert_layer_forward.9} parent=1 // pred_check_branch
      %17 = sbr.rel (0) target = $region13
    $region12: #{bert_layer_forward.9} parent=1 // pred_region
      _
    $region13: #{bert_layer_forward.9} parent=1 // pred_fallthru
      _
    // Predicated region
    $region14: #{bert_layer_forward.9} parent=1 // pred_check
      _
    $region15: #{bert_layer_forward.9} parent=1 // pred_check_branch
      %19 = sbr.rel (0) target = $region17
    $region16: #{bert_layer_forward.9} parent=1 // pred_region
      _
    $region17: #{bert_layer_forward.9} parent=1 // pred_fallthru
      _
    // Predicated region
    $region18: #{bert_layer_forward.9} parent=1 // pred_check
      _
    $region19: #{bert_layer_forward.9} parent=1 // pred_check_branch
      %21 = sbr.rel (0) target = $region21
    $region20: #{bert_layer_forward.9} parent=1 // pred_region
      _
    $region21: #{bert_layer_forward.9} parent=1 // pred_fallthru
      _
    // Predicated region
    $region22: #{bert_layer_forward.9} parent=1 // pred_check
      _
    $region23: #{bert_layer_forward.9} parent=1 // pred_check_branch
      %23 = sbr.rel (0) target = $region25
    $region24: #{bert_layer_forward.9} parent=1 // pred_region
      _
    $region25: #{bert_layer_forward.9} parent=1 // pred_fallthru
      _
    %v24 = vld [vmem:[%s0] sm:$0xff]
    %v25 = vld [vmem:[%s0 + $0x8] sm:$0xff]
    %v26 = vld [vmem:[%s1] sm:$0xff]
    %v27 = vld [vmem:[%s1 + $0x8] sm:$0xff]
    %v28 = vld [vmem:[%s1 + $0x10] sm:$0xff]
    %v29 = vld [vmem:[%s1 + $0x18] sm:$0xff]
    %v30 = vld [vmem:[%s1 + $0x20] sm:$0xff]
    %v31 = vld [vmem:[%s1 + $0x28] sm:$0xff]
    %v32 = vld [vmem:[%s1 + $0x30] sm:$0xff]
    %v33 = vld [vmem:[%s1 + $0x38] sm:$0xff]
    %v34 = vld [vmem:[%s1 + $0x40] sm:$0xff]
    %v35 = vld [vmem:[%s1 + $0x48] sm:$0xff]
    %v36 = vld [vmem:[%s1 + $0x50] sm:$0xff]
    %v37 = vld [vmem:[%s1 + $0x58] sm:$0xff]
    %v38 = vld [vmem:[%s1 + $0x60] sm:$0xff]
    %v39 = vld [vmem:[%s1 + $0x68] sm:$0xff]
    %v40 = vld [vmem:[%s1 + $0x70] sm:$0xff]
    %v41 = vld [vmem:[%s1 + $0x78] sm:$0xff]
    %v42 = vld [vmem:[%s2] sm:$0x1]
    %v44 = vlaneseq
    %v45 = vshrl.u32 %v44, 7
    %v46 = vsub.s32 0, %v45
    %v47 = vrot.slane %v42, %v46
    %49 = vmatprep.subr.mxu0 0.0
    %50 = vmatpush1.msra.mxu0 %v26
    %51 = vmatprep.subr.mxu0 0.0
    %52 = vmatpush1.msra.mxu0 %v27
    %53 = vmatprep.subr.mxu0 0.0
    %54 = vmatpush1.msra.mxu0 %v28
    %55 = vmatprep.subr.mxu0 0.0
    %56 = vmatpush1.msra.mxu0 %v29
    %57 = vmatprep.subr.mxu0 0.0
    %58 = vmatpush1.msra.mxu0 %v30
    %59 = vmatprep.subr.mxu0 0.0
    %60 = vmatpush1.msra.mxu0 %v31
    %61 = vmatprep.subr.mxu0 0.0
    %62 = vmatpush1.msra.mxu0 %v32
    %63 = vmatprep.subr.mxu0 0.0
    %64 = vmatpush1.msra.mxu0 %v33
    %65 = vmatprep.subr.mxu0 0.0
    %66 = vmatpush1.msra.mxu0 %v34
    %67 = vmatprep.subr.mxu0 0.0
    %68 = vmatpush1.msra.mxu0 %v35
    %69 = vmatprep.subr.mxu0 0.0
    %70 = vmatpush1.msra.mxu0 %v36
    %71 = vmatprep.subr.mxu0 0.0
    %72 = vmatpush1.msra.mxu0 %v37
    %73 = vmatprep.subr.mxu0 0.0
    %74 = vmatpush1.msra.mxu0 %v38
    %75 = vmatprep.subr.mxu0 0.0
    %76 = vmatpush1.msra.mxu0 %v39
    %77 = vmatprep.subr.mxu0 0.0
    %78 = vmatpush1.msra.mxu0 %v40
    %79 = vmatprep.subr.mxu0 0.0
    %80 = vmatpush1.msra.mxu0 %v41
    %81 = vmatprep.subr.mxu0 0.0
    %82 = vmatpush1.msra.mxu0 0.0
    %83 = vmatprep.subr.mxu0 0.0
    %84 = vmatpush1.msra.mxu0 0.0
    %85 = vmatprep.subr.mxu0 0.0
    %86 = vmatpush1.msra.mxu0 0.0
    %87 = vmatprep.subr.mxu0 0.0
    %88 = vmatpush1.msra.mxu0 0.0
    %89 = vmatprep.subr.mxu0 0.0
    %90 = vmatpush1.msra.mxu0 0.0
    %91 = vmatprep.subr.mxu0 0.0
    %92 = vmatpush1.msra.mxu0 0.0
    %93 = vmatprep.subr.mxu0 0.0
    %94 = vmatpush1.msra.mxu0 0.0
    %95 = vmatprep.subr.mxu0 0.0
    %96 = vmatpush1.msra.mxu0 0.0
    %97 = vmatprep.subr.mxu0 0.0
    %98 = vmatpush1.msra.mxu0 0.0
    %99 = vmatprep.subr.mxu0 0.0
    %100 = vmatpush1.msra.mxu0 0.0
    %101 = vmatprep.subr.mxu0 0.0
    %102 = vmatpush1.msra.mxu0 0.0
    %103 = vmatprep.subr.mxu0 0.0
    %104 = vmatpush1.msra.mxu0 0.0
    %105 = vmatprep.subr.mxu0 0.0
    %106 = vmatpush1.msra.mxu0 0.0
    %107 = vmatprep.subr.mxu0 0.0
    %108 = vmatpush1.msra.mxu0 0.0
    %109 = vmatprep.subr.mxu0 0.0
    %110 = vmatpush1.msra.mxu0 0.0
    %111 = vmatprep.subr.mxu0 0.0
    %112 = vmatpush1.msra.mxu0 0.0
    %113 = vmatprep.mubr.f32.mxu0 0.0
    %114 = vmatmul.mubr.f32.gmra.mrb[0].mxu0 %v24
    %v115 = vpop.f32.mrb[0].mxu0
    %v116 = vadd.f32 %v47, %v115
    %v117 = vpop.f32.mrb[0].mxu0
    %118 = vmatprep.mubr.f32.mxu0 0.0
    %119 = vmatmul.mubr.f32.gmra.mrb[0].mxu0 %v25
    %v120 = vpop.f32.mrb[0].mxu0
    %v121 = vadd.f32 %v47, %v120
    %v122 = vpop.f32.mrb[0].mxu0
    %123 = vdwg.mxu0
    %v124 = vld [vmem:[%s3] sm:$0xff]
    %v125 = vld [vmem:[%s3 + $0x8] sm:$0xff]
    %v126 = vadd.f32 %v116, %v124
    %v127 = vadd.f32 %v121, %v125
    %vm128 = vcmask 261120
    %v129 = vsel %vm128, %v126, 0.0
    %130 = vadd.xlane.f32.xlu0 %v129
    %v131 = vpop.xlane.xlu0 %130
    %v132 = vsel %vm128, %v127, 0.0
    %133 = vadd.xlane.f32.xlu0 %v132
    %v134 = vpop.xlane.xlu0 %133
    %v135 = vrcp.pop 32.0
    %v136 = vmul.f32 %v131, %v135
    %v137 = vmul.f32 %v134, %v135
    %v138 = vsub.f32 %v126, %v136
    %v139 = vsub.f32 %v127, %v137
    %v140 = vmul.f32 %v138, %v138
    %v141 = vmul.f32 %v139, %v139
    %v142 = vsel %vm128, %v140, 0.0
    %143 = vadd.xlane.f32.xlu0 %v142
    %v144 = vpop.xlane.xlu0 %143
    %v145 = vsel %vm128, %v141, 0.0
    %146 = vadd.xlane.f32.xlu0 %v145
    %v147 = vpop.xlane.xlu0 %146
    %v148 = vmul.f32 %v144, %v135
    %v149 = vmul.f32 %v147, %v135
    %v150 = vadd.f32 %v148, 1e-12
    %v151 = vadd.f32 %v149, 1e-12
    %v152 = vrsqrt.pop %v150
    %v153 = vrsqrt.pop %v151
    %v154 = vmul.f32 %v138, %v152
    %v155 = vmul.f32 %v139, %v153
    %v156 = vld [vmem:[%s4] sm:$0x1]
    %v158 = vlaneseq
    %v159 = vshrl.u32 %v158, 7
    %v160 = vsub.s32 0, %v159
    %v161 = vrot.slane %v156, %v160
    %v163 = vmul.f32 %v154, %v161
    %v164 = vmul.f32 %v155, %v161
    %v165 = vld [vmem:[%s5] sm:$0x1]
    %v167 = vlaneseq
    %v168 = vshrl.u32 %v167, 7
    %v169 = vsub.s32 0, %v168
    %v170 = vrot.slane %v165, %v169
    %v172 = vadd.f32 %v163, %v170
    %v173 = vadd.f32 %v164, %v170
    %174 = vst.msk [vmem:[#allocation2] sm:$0xff] %vm128, %v172
    %175 = vst.msk [vmem:[#allocation2 + $0x8] sm:$0xff] %vm128, %v173
    // Predicated region
    $region26: #{bert_layer_forward.9} parent=1 // pred_check
      _
    $region27: #{bert_layer_forward.9} parent=1 // pred_check_branch
      %177 = sbr.rel (0) target = $region29
    $region28: #{bert_layer_forward.9} parent=1 // pred_region
      %s179 = ssub.s32 256, 256
      %180 = vsyncadd [#allocation3], %s179
      %s181 = sshll.u32 [#allocation2], 4
      %s182 = int_to_ptr.vmem [resolvable:$true] %s181
      %187 = dma.vmem_to_hbm [thread:$0]  %s182, 256, %s6, [#allocation3], 128, 128, 8
    $region29: #{bert_layer_forward.9} parent=1 // pred_fallthru
      _
    // Predicated region
    $region30: #{bert_layer_forward.9} parent=1 // pred_check
      _
    $region31: #{bert_layer_forward.9} parent=1 // pred_check_branch
      %189 = sbr.rel (0) target = $region33
    $region32: #{bert_layer_forward.9} parent=1 // pred_region
      %190 = dma.done [#allocation3], 256
    $region33: #{bert_layer_forward.9} parent=1 // pred_fallthru
      _
    %191 = vsyncpa [#allocation3], 1

</llo_original>
